<compile_context>
chip_gen: v7x
topology: tpu7x:2x2x1
jax: 0.10.0
libtpu: 0.0.40
codegen_flags: <defaults>
</compile_context>

<pallas_src>
import jax
import jax.numpy as jnp
from jax.experimental import pallas as pl
from jax.experimental.pallas import tpu as pltpu


def _sigmoid(x):
    # 1 / (1 + exp(-x)); exp and the approximate reciprocal both ride the EUP
    # slot, one Newton-Raphson step restores full f32 accuracy on the VALU.
    x = jnp.maximum(x, -60.0)          # keep exp(-x) finite for extreme inputs
    d = 1.0 + jnp.exp(-x)
    r = pl.reciprocal(d, approx=True)
    return r * (2.0 - d * r)


def _fused_double_conv1x1_kernel(x_ref, w0_ref, b0_ref, w1_ref, b1_ref, o_ref):
    # x_ref / o_ref: (n_blk, C, t_hw) VMEM tiles (spatial on lanes).
    # w*_ref: (C, C) f32 in VMEM, b*_ref: (C, 1) f32 in VMEM.
    w0 = w0_ref[...]
    b0 = b0_ref[...]
    w1 = w1_ref[...]
    b1 = b1_ref[...]
    n_blk = x_ref.shape[0]
    for n in range(n_blk):             # static, small unroll
        x = x_ref[n].astype(jnp.float32)                       # (C, t_hw)
        # layer0: 1x1 conv == channel matmul on the MXU, then sigmoid.
        y = _sigmoid(
            jnp.dot(w0, x, preferred_element_type=jnp.float32,
                    precision=jax.lax.Precision.HIGHEST) + b0)
        # layer1: same contraction on layer0's output, then sigmoid.
        z = _sigmoid(
            jnp.dot(w1, y, preferred_element_type=jnp.float32,
                    precision=jax.lax.Precision.HIGHEST) + b1)
        o_ref[n] = z.astype(o_ref.dtype)


@jax.jit
def sample_module2_forward(x_nchw, w0, b0, w1, b1):
    """x_nchw: (N, C, H, W).  w*: (C_out, C_in, 1, 1).  b*: (C_out,)."""
    N, C, H, W = x_nchw.shape
    HW = H * W
    elt = jnp.dtype(x_nchw.dtype).itemsize

    # Free view: NCHW contiguous -> (N, C, H*W).  No transposes anywhere.
    x3 = x_nchw.reshape(N, C, HW)

    # Spatial tiling: lane-dense chunks (multiple of 128).  Large cap so big
    # inputs amortize the ~0.35us/step overhead; tiles stay KiB-scale.
    max_t_hw = 16384
    if HW <= max_t_hw:
        t_hw = -(-HW // 128) * 128            # round up to multiple of 128
    else:
        t_hw = max_t_hw
    HW_pad = -(-HW // t_hw) * t_hw
    if HW_pad != HW:
        # Ragged tail only for HW not a multiple of 128 / t_hw (not hit by the
        # test shape).  Padded tail is computed (sigmoid of bias) and sliced.
        x3 = jnp.pad(x3, ((0, 0), (0, 0), (0, HW_pad - HW)))

    # Fold the whole batch into one block when it is small (single pipeline
    # step / single DMA pair); otherwise tile over batch as well.
    n_blk = N if N * C * t_hw * elt <= (1 << 20) else 1
    grid = (N // n_blk, HW_pad // t_hw)

    # Conv weights (C_out, C_in, 1, 1) -> (C_out, C_in); biases -> (C, 1);
    # both kept resident in VMEM (full-array blocks, constant index map).
    w0_m = w0.reshape(C, C).astype(jnp.float32)
    w1_m = w1.reshape(C, C).astype(jnp.float32)
    b0_m = b0.reshape(C, 1).astype(jnp.float32)
    b1_m = b1.reshape(C, 1).astype(jnp.float32)

    w_spec = pl.BlockSpec((C, C), lambda b, j: (0, 0))
    b_spec = pl.BlockSpec((C, 1), lambda b, j: (0, 0))
    xo_spec = pl.BlockSpec((n_blk, C, t_hw), lambda b, j: (b, 0, j))

    cost = pl.CostEstimate(
        flops=2 * N * HW_pad * (2 * C * C + C),          # two 1x1 convs + bias
        transcendentals=2 * 2 * N * HW_pad * C,          # exp + rcp, two layers
        bytes_accessed=2 * N * C * HW_pad * elt + 2 * C * C * 4 + 2 * C * 4,
    )

    out3 = pl.pallas_call(
        _fused_double_conv1x1_kernel,
        out_shape=jax.ShapeDtypeStruct((N, C, HW_pad), x_nchw.dtype),
        grid=grid,
        in_specs=[
            xo_spec,    # x tile
            w_spec,     # W0 (VMEM resident)
            b_spec,     # b0
            w_spec,     # W1
            b_spec,     # b1
        ],
        out_specs=xo_spec,
        compiler_params=pltpu.CompilerParams(
            dimension_semantics=("parallel", "parallel")),
        cost_estimate=cost,
    )(x3, w0_m, b0_m, w1_m, b1_m)

    if HW_pad != HW:
        out3 = out3[:, :, :HW]
    return out3.reshape(N, C, H, W)


def _reference_forward(x_nchw, w0, b0, w1, b1):
    """Pure-JAX reference (1x1 conv == channel matmul) for verification."""
    N, C, H, W = x_nchw.shape
    x = jnp.transpose(x_nchw, (0, 2, 3, 1)).reshape(-1, C)
    y = jax.nn.sigmoid(x @ w0.reshape(C, C).T + b0)
    z = jax.nn.sigmoid(y @ w1.reshape(C, C).T + b1)
    return z.reshape(N, H, W, C).transpose(0, 3, 1, 2)


if __name__ == "__main__":
    # Small shapes consistent with the module (num_features = channels = 4).
    N, C, H, W = 2, 4, 16, 16

    key = jax.random.PRNGKey(0)
    kx, kw0, kb0, kw1, kb1 = jax.random.split(key, 5)

    x = jax.random.normal(kx, (N, C, H, W), dtype=jnp.float32)

    # Deterministic init mimicking Conv2d's uniform(-1/sqrt(fan_in), 1/sqrt(fan_in)).
    bound = 1.0 / jnp.sqrt(jnp.float32(C * 1 * 1))
    w0 = jax.random.uniform(kw0, (C, C, 1, 1), jnp.float32, -bound, bound)
    b0 = jax.random.uniform(kb0, (C,), jnp.float32, -bound, bound)
    w1 = jax.random.uniform(kw1, (C, C, 1, 1), jnp.float32, -bound, bound)
    b1 = jax.random.uniform(kb1, (C,), jnp.float32, -bound, bound)

    out = sample_module2_forward(x, w0, b0, w1, b1)
    out = jax.block_until_ready(out)

    ref = _reference_forward(x, w0, b0, w1, b1)
    assert out.shape == (N, C, H, W), out.shape
    assert jnp.allclose(out, ref, atol=2e-5, rtol=2e-5), "mismatch vs reference"

    print("KERNEL_OK")
</pallas_src>

<mosaic_0001>
module attributes {stable_mosaic.version = 11 : i64} {
  func.func @_fused_double_conv1x1_kernel(%arg0: i32, %arg1: i32, %arg2: memref<2x4x256xf32, #tpu.memory_space<vmem>>, %arg3: memref<4x4xf32, #tpu.memory_space<vmem>>, %arg4: memref<4x1xf32, #tpu.memory_space<vmem>>, %arg5: memref<4x4xf32, #tpu.memory_space<vmem>>, %arg6: memref<4x1xf32, #tpu.memory_space<vmem>>, %arg7: memref<2x4x256xf32, #tpu.memory_space<vmem>>) attributes {dimension_semantics = [#tpu.dimension_semantics<parallel>, #tpu.dimension_semantics<parallel>], iteration_bounds = array<i64: 1, 1>, scalar_prefetch = 0 : i64, scratch_operands = 0 : i64, tpu.core_type = #tpu.core_type<tc>, window_params = [{transform_indices = @transform_0, window_bounds = array<i64: 2, 4, 256>}, {pipeline_mode = #tpu.pipeline_mode<synchronous>, transform_indices = @transform_1, window_bounds = array<i64: 4, 4>}, {pipeline_mode = #tpu.pipeline_mode<synchronous>, transform_indices = @transform_2, window_bounds = array<i64: 4, 1>}, {pipeline_mode = #tpu.pipeline_mode<synchronous>, transform_indices = @transform_3, window_bounds = array<i64: 4, 4>}, {pipeline_mode = #tpu.pipeline_mode<synchronous>, transform_indices = @transform_4, window_bounds = array<i64: 4, 1>}, {transform_indices = @transform_5, window_bounds = array<i64: 2, 4, 256>}]} {
    %c0 = arith.constant 0 : index
    %c0_0 = arith.constant 0 : index
    %0 = vector.load %arg3[%c0, %c0_0] : memref<4x4xf32, #tpu.memory_space<vmem>>, vector<4x4xf32>
    %c0_1 = arith.constant 0 : index
    %c0_2 = arith.constant 0 : index
    %1 = vector.load %arg4[%c0_1, %c0_2] : memref<4x1xf32, #tpu.memory_space<vmem>>, vector<4x1xf32>
    %c0_3 = arith.constant 0 : index
    %c0_4 = arith.constant 0 : index
    %2 = vector.load %arg5[%c0_3, %c0_4] : memref<4x4xf32, #tpu.memory_space<vmem>>, vector<4x4xf32>
    %c0_5 = arith.constant 0 : index
    %c0_6 = arith.constant 0 : index
    %3 = vector.load %arg6[%c0_5, %c0_6] : memref<4x1xf32, #tpu.memory_space<vmem>>, vector<4x1xf32>
    %c0_7 = arith.constant 0 : index
    %c0_8 = arith.constant 0 : index
    %c0_9 = arith.constant 0 : index
    %4 = vector.load %arg2[%c0_7, %c0_8, %c0_9] : memref<2x4x256xf32, #tpu.memory_space<vmem>>, vector<1x4x256xf32>
    %5 = vector.shape_cast %4 : vector<1x4x256xf32> to vector<4x256xf32>
    %cst = arith.constant dense<0.000000e+00> : vector<4x256xf32>
    %6 = tpu.matmul %0, %5, %cst {dimension_numbers = #tpu.dot_dimension_numbers<[1], [0], [0], [1], [0, 0, 1, 1], [], []>, precision = #tpu.contract_precision<fp32>} : vector<4x4xf32>, vector<4x256xf32>, vector<4x256xf32> -> vector<4x256xf32>
    %7 = vector.broadcast %1 : vector<4x1xf32> to vector<4x256xf32>
    %8 = arith.addf %6, %7 : vector<4x256xf32>
    %cst_10 = arith.constant -6.000000e+01 : f32
    %9 = vector.broadcast %cst_10 : f32 to vector<4x256xf32>
    %10 = arith.maximumf %8, %9 : vector<4x256xf32>
    %cst_11 = arith.constant 0.000000e+00 : f32
    %11 = vector.broadcast %cst_11 : f32 to vector<4x256xf32>
    %12 = arith.subf %11, %10 : vector<4x256xf32>
    %13 = math.exp %12 : vector<4x256xf32>
    %cst_12 = arith.constant 1.000000e+00 : f32
    %14 = vector.broadcast %cst_12 : f32 to vector<4x256xf32>
    %15 = arith.addf %14, %13 : vector<4x256xf32>
    %16 = tpu.reciprocal %15 {approx = true} : vector<4x256xf32> -> vector<4x256xf32>
    %17 = arith.mulf %15, %16 : vector<4x256xf32>
    %cst_13 = arith.constant 2.000000e+00 : f32
    %18 = vector.broadcast %cst_13 : f32 to vector<4x256xf32>
    %19 = arith.subf %18, %17 : vector<4x256xf32>
    %20 = arith.mulf %16, %19 : vector<4x256xf32>
    %cst_14 = arith.constant dense<0.000000e+00> : vector<4x256xf32>
    %21 = tpu.matmul %2, %20, %cst_14 {dimension_numbers = #tpu.dot_dimension_numbers<[1], [0], [0], [1], [0, 0, 1, 1], [], []>, precision = #tpu.contract_precision<fp32>} : vector<4x4xf32>, vector<4x256xf32>, vector<4x256xf32> -> vector<4x256xf32>
    %22 = vector.broadcast %3 : vector<4x1xf32> to vector<4x256xf32>
    %23 = arith.addf %21, %22 : vector<4x256xf32>
    %cst_15 = arith.constant -6.000000e+01 : f32
    %24 = vector.broadcast %cst_15 : f32 to vector<4x256xf32>
    %25 = arith.maximumf %23, %24 : vector<4x256xf32>
    %cst_16 = arith.constant 0.000000e+00 : f32
    %26 = vector.broadcast %cst_16 : f32 to vector<4x256xf32>
    %27 = arith.subf %26, %25 : vector<4x256xf32>
    %28 = math.exp %27 : vector<4x256xf32>
    %cst_17 = arith.constant 1.000000e+00 : f32
    %29 = vector.broadcast %cst_17 : f32 to vector<4x256xf32>
    %30 = arith.addf %29, %28 : vector<4x256xf32>
    %31 = tpu.reciprocal %30 {approx = true} : vector<4x256xf32> -> vector<4x256xf32>
    %32 = arith.mulf %30, %31 : vector<4x256xf32>
    %cst_18 = arith.constant 2.000000e+00 : f32
    %33 = vector.broadcast %cst_18 : f32 to vector<4x256xf32>
    %34 = arith.subf %33, %32 : vector<4x256xf32>
    %35 = arith.mulf %31, %34 : vector<4x256xf32>
    %c0_19 = arith.constant 0 : index
    %c0_20 = arith.constant 0 : index
    %c0_21 = arith.constant 0 : index
    %36 = vector.load %arg7[%c0_19, %c0_20, %c0_21] : memref<2x4x256xf32, #tpu.memory_space<vmem>>, vector<1x4x256xf32>
    %37 = vector.shape_cast %36 : vector<1x4x256xf32> to vector<4x256xf32>
    %38 = vector.shape_cast %35 : vector<4x256xf32> to vector<1x4x256xf32>
    tpu.vector_store %arg7[%c0_19, %c0_20, %c0_21], %38 {strides = array<i32>} : memref<2x4x256xf32, #tpu.memory_space<vmem>>, vector<1x4x256xf32>,
    %c1 = arith.constant 1 : index
    %c0_22 = arith.constant 0 : index
    %c0_23 = arith.constant 0 : index
    %39 = vector.load %arg2[%c1, %c0_22, %c0_23] : memref<2x4x256xf32, #tpu.memory_space<vmem>>, vector<1x4x256xf32>
    %40 = vector.shape_cast %39 : vector<1x4x256xf32> to vector<4x256xf32>
    %cst_24 = arith.constant dense<0.000000e+00> : vector<4x256xf32>
    %41 = tpu.matmul %0, %40, %cst_24 {dimension_numbers = #tpu.dot_dimension_numbers<[1], [0], [0], [1], [0, 0, 1, 1], [], []>, precision = #tpu.contract_precision<fp32>} : vector<4x4xf32>, vector<4x256xf32>, vector<4x256xf32> -> vector<4x256xf32>
    %42 = vector.broadcast %1 : vector<4x1xf32> to vector<4x256xf32>
    %43 = arith.addf %41, %42 : vector<4x256xf32>
    %cst_25 = arith.constant -6.000000e+01 : f32
    %44 = vector.broadcast %cst_25 : f32 to vector<4x256xf32>
    %45 = arith.maximumf %43, %44 : vector<4x256xf32>
    %cst_26 = arith.constant 0.000000e+00 : f32
    %46 = vector.broadcast %cst_26 : f32 to vector<4x256xf32>
    %47 = arith.subf %46, %45 : vector<4x256xf32>
    %48 = math.exp %47 : vector<4x256xf32>
    %cst_27 = arith.constant 1.000000e+00 : f32
    %49 = vector.broadcast %cst_27 : f32 to vector<4x256xf32>
    %50 = arith.addf %49, %48 : vector<4x256xf32>
    %51 = tpu.reciprocal %50 {approx = true} : vector<4x256xf32> -> vector<4x256xf32>
    %52 = arith.mulf %50, %51 : vector<4x256xf32>
    %cst_28 = arith.constant 2.000000e+00 : f32
    %53 = vector.broadcast %cst_28 : f32 to vector<4x256xf32>
    %54 = arith.subf %53, %52 : vector<4x256xf32>
    %55 = arith.mulf %51, %54 : vector<4x256xf32>
    %cst_29 = arith.constant dense<0.000000e+00> : vector<4x256xf32>
    %56 = tpu.matmul %2, %55, %cst_29 {dimension_numbers = #tpu.dot_dimension_numbers<[1], [0], [0], [1], [0, 0, 1, 1], [], []>, precision = #tpu.contract_precision<fp32>} : vector<4x4xf32>, vector<4x256xf32>, vector<4x256xf32> -> vector<4x256xf32>
    %57 = vector.broadcast %3 : vector<4x1xf32> to vector<4x256xf32>
    %58 = arith.addf %56, %57 : vector<4x256xf32>
    %cst_30 = arith.constant -6.000000e+01 : f32
    %59 = vector.broadcast %cst_30 : f32 to vector<4x256xf32>
    %60 = arith.maximumf %58, %59 : vector<4x256xf32>
    %cst_31 = arith.constant 0.000000e+00 : f32
    %61 = vector.broadcast %cst_31 : f32 to vector<4x256xf32>
    %62 = arith.subf %61, %60 : vector<4x256xf32>
    %63 = math.exp %62 : vector<4x256xf32>
    %cst_32 = arith.constant 1.000000e+00 : f32
    %64 = vector.broadcast %cst_32 : f32 to vector<4x256xf32>
    %65 = arith.addf %64, %63 : vector<4x256xf32>
    %66 = tpu.reciprocal %65 {approx = true} : vector<4x256xf32> -> vector<4x256xf32>
    %67 = arith.mulf %65, %66 : vector<4x256xf32>
    %cst_33 = arith.constant 2.000000e+00 : f32
    %68 = vector.broadcast %cst_33 : f32 to vector<4x256xf32>
    %69 = arith.subf %68, %67 : vector<4x256xf32>
    %70 = arith.mulf %66, %69 : vector<4x256xf32>
    %c1_34 = arith.constant 1 : index
    %c0_35 = arith.constant 0 : index
    %c0_36 = arith.constant 0 : index
    %71 = vector.load %arg7[%c1_34, %c0_35, %c0_36] : memref<2x4x256xf32, #tpu.memory_space<vmem>>, vector<1x4x256xf32>
    %72 = vector.shape_cast %71 : vector<1x4x256xf32> to vector<4x256xf32>
    %73 = vector.shape_cast %70 : vector<4x256xf32> to vector<1x4x256xf32>
    tpu.vector_store %arg7[%c1_34, %c0_35, %c0_36], %73 {strides = array<i32>} : memref<2x4x256xf32, #tpu.memory_space<vmem>>, vector<1x4x256xf32>,
    return
  }
  func.func @transform_0(%arg0: i32, %arg1: i32) -> (i32, i32, i32) {
    %c0_i32 = arith.constant 0 : i32
    %c0_i32_0 = arith.constant 0 : i32
    return %arg0, %c0_i32, %arg1 : i32, i32, i32
  }
  func.func @transform_1(%arg0: i32, %arg1: i32) -> (i32, i32) {
    %c0_i32 = arith.constant 0 : i32
    %c0_i32_0 = arith.constant 0 : i32
    %c0_i32_1 = arith.constant 0 : i32
    return %c0_i32, %c0_i32_0 : i32, i32
  }
  func.func @transform_2(%arg0: i32, %arg1: i32) -> (i32, i32) {
    %c0_i32 = arith.constant 0 : i32
    %c0_i32_0 = arith.constant 0 : i32
    %c0_i32_1 = arith.constant 0 : i32
    return %c0_i32, %c0_i32_0 : i32, i32
  }
  func.func @transform_3(%arg0: i32, %arg1: i32) -> (i32, i32) {
    %c0_i32 = arith.constant 0 : i32
    %c0_i32_0 = arith.constant 0 : i32
    %c0_i32_1 = arith.constant 0 : i32
    return %c0_i32, %c0_i32_0 : i32, i32
  }
  func.func @transform_4(%arg0: i32, %arg1: i32) -> (i32, i32) {
    %c0_i32 = arith.constant 0 : i32
    %c0_i32_0 = arith.constant 0 : i32
    %c0_i32_1 = arith.constant 0 : i32
    return %c0_i32, %c0_i32_0 : i32, i32
  }
  func.func @transform_5(%arg0: i32, %arg1: i32) -> (i32, i32, i32) {
    %c0_i32 = arith.constant 0 : i32
    %c0_i32_0 = arith.constant 0 : i32
    return %arg0, %c0_i32, %arg1 : i32, i32, i32
  }
}

</mosaic_0001>

<llo_original>
// kernel: sample_module2_forward.1
$region0: #{sample_module2_forward.1}
  #allocation0 [shape = 'u32[]', space=smem, size = 0x4, offset = 0x4, fixed_abs, tag = 'smem constant byte address 0x4 - core index']
  #allocation1 [shape = 'u32[144,128]{1,0:T(1,128)}', space=vmem, size = 0x12000, scoped, tag = 'internal scratch']
  %s0 = inlined_call_operand.vmem [shape: f32[2,4,256], index: 0, kind: input, shape index: {}]
  %s1 = inlined_call_operand.vmem [shape: f32[4,4], index: 1, kind: input, shape index: {}]
  %s2 = inlined_call_operand.vmem [shape: f32[4,1], index: 2, kind: input, shape index: {}]
  %s3 = inlined_call_operand.vmem [shape: f32[4,4], index: 3, kind: input, shape index: {}]
  %s4 = inlined_call_operand.vmem [shape: f32[4,1], index: 4, kind: input, shape index: {}]
  %s5 = inlined_call_operand.vmem [shape: f32[2,4,256], index: 5, kind: output, shape index: {}]
  %s6 = sld [smem:[#allocation0]]
  $region30: #{sample_module2_forward.1} parent=0
    _
  %s8 = ssub.s32 1, %s6
  %s9 = scalar_select 0, %s8, %s6
  // Predicated region
  $region2: #{sample_module2_forward.1} parent=0 // pred_check
    _
  $region3: #{sample_module2_forward.1} parent=0 // pred_check_branch
    %11 = sbr.rel (0) target = $region5
  $region4: #{sample_module2_forward.1} parent=0 // pred_region
    _
  $region5: #{sample_module2_forward.1} parent=0 // pred_fallthru
    _
  // Predicated region
  $region6: #{sample_module2_forward.1} parent=0 // pred_check
    _
  $region7: #{sample_module2_forward.1} parent=0 // pred_check_branch
    %13 = sbr.rel (0) target = $region9
  $region8: #{sample_module2_forward.1} parent=0 // pred_region
    _
  $region9: #{sample_module2_forward.1} parent=0 // pred_fallthru
    _
  // Predicated region
  $region10: #{sample_module2_forward.1} parent=0 // pred_check
    _
  $region11: #{sample_module2_forward.1} parent=0 // pred_check_branch
    %15 = sbr.rel (0) target = $region13
  $region12: #{sample_module2_forward.1} parent=0 // pred_region
    _
  $region13: #{sample_module2_forward.1} parent=0 // pred_fallthru
    _
  // Predicated region
  $region14: #{sample_module2_forward.1} parent=0 // pred_check
    _
  $region15: #{sample_module2_forward.1} parent=0 // pred_check_branch
    %17 = sbr.rel (0) target = $region17
  $region16: #{sample_module2_forward.1} parent=0 // pred_region
    _
  $region17: #{sample_module2_forward.1} parent=0 // pred_fallthru
    _
  // Predicated region
  $region18: #{sample_module2_forward.1} parent=0 // pred_check
    _
  $region19: #{sample_module2_forward.1} parent=0 // pred_check_branch
    %19 = sbr.rel (0) target = $region21
  $region20: #{sample_module2_forward.1} parent=0 // pred_region
    _
  $region21: #{sample_module2_forward.1} parent=0 // pred_fallthru
    _
  %v20 = vld [vmem:[%s1] sm:$0xf]
  %v21 = vld [vmem:[%s2] sm:$0xf]
  %v22 = vld [vmem:[%s3] sm:$0xf]
  %v23 = vld [vmem:[%s4] sm:$0xf]
  %v24 = vld [vmem:[%s0] sm:$0xff]
  %26 = vset.pattern.permute.xlu0 0
  %27 = vperm.xlu0 %26, %v21
  %v28 = vpop.permute.xlu0 %27
  %v31 = vcombine.high %v24, %v24
  %vm32 = vcmask 31744
  %v34 = vsel %vm32, %v20, 0
  %vm36 = vcmask 1043456
  %v37 = vsel %vm36, %v24, 0
  %v39 = vsel %vm36, %v31, 0
  %v41 = vand.u32 %v39, 4294901760
  %42 = vmatprep.subr.mxu0 %v41
  %v43 = vand.u32 %v37, 4294901760
  %44 = vmatpush1.msra.mxu0 %v43
  %45 = vmatprep.subr.mxu0 0.0
  %46 = vmatpush1.msra.mxu0 0.0
  %47 = vmatprep.subr.mxu0 0.0
  %48 = vmatpush1.msra.mxu0 0.0
  %49 = vmatprep.subr.mxu0 0.0
  %50 = vmatpush1.msra.mxu0 0.0
  %51 = vmatprep.subr.mxu0 0.0
  %52 = vmatpush1.msra.mxu0 0.0
  %53 = vmatprep.subr.mxu0 0.0
  %54 = vmatpush1.msra.mxu0 0.0
  %55 = vmatprep.subr.mxu0 0.0
  %56 = vmatpush1.msra.mxu0 0.0
  %57 = vmatprep.subr.mxu0 0.0
  %58 = vmatpush1.msra.mxu0 0.0
  %59 = vmatprep.subr.mxu0 0.0
  %60 = vmatpush1.msra.mxu0 0.0
  %61 = vmatprep.subr.mxu0 0.0
  %62 = vmatpush1.msra.mxu0 0.0
  %63 = vmatprep.subr.mxu0 0.0
  %64 = vmatpush1.msra.mxu0 0.0
  %65 = vmatprep.subr.mxu0 0.0
  %66 = vmatpush1.msra.mxu0 0.0
  %67 = vmatprep.subr.mxu0 0.0
  %68 = vmatpush1.msra.mxu0 0.0
  %69 = vmatprep.subr.mxu0 0.0
  %70 = vmatpush1.msra.mxu0 0.0
  %71 = vmatprep.subr.mxu0 0.0
  %72 = vmatpush1.msra.mxu0 0.0
  %73 = vmatprep.subr.mxu0 0.0
  %74 = vmatpush1.msra.mxu0 0.0
  %75 = vmatprep.subr.mxu0 0.0
  %76 = vmatpush1.msra.mxu0 0.0
  %77 = vmatprep.subr.mxu0 0.0
  %78 = vmatpush1.msra.mxu0 0.0
  %79 = vmatprep.subr.mxu0 0.0
  %80 = vmatpush1.msra.mxu0 0.0
  %81 = vmatprep.subr.mxu0 0.0
  %82 = vmatpush1.msra.mxu0 0.0
  %83 = vmatprep.subr.mxu0 0.0
  %84 = vmatpush1.msra.mxu0 0.0
  %85 = vmatprep.subr.mxu0 0.0
  %86 = vmatpush1.msra.mxu0 0.0
  %87 = vmatprep.subr.mxu0 0.0
  %88 = vmatpush1.msra.mxu0 0.0
  %89 = vmatprep.subr.mxu0 0.0
  %90 = vmatpush1.msra.mxu0 0.0
  %91 = vmatprep.subr.mxu0 0.0
  %92 = vmatpush1.msra.mxu0 0.0
  %93 = vmatprep.subr.mxu0 0.0
  %94 = vmatpush1.msra.mxu0 0.0
  %95 = vmatprep.subr.mxu0 0.0
  %96 = vmatpush1.msra.mxu0 0.0
  %97 = vmatprep.subr.mxu0 0.0
  %98 = vmatpush1.msra.mxu0 0.0
  %99 = vmatprep.subr.mxu0 0.0
  %100 = vmatpush1.msra.mxu0 0.0
  %101 = vmatprep.subr.mxu0 0.0
  %102 = vmatpush1.msra.mxu0 0.0
  %103 = vmatprep.subr.mxu0 0.0
  %104 = vmatpush1.msra.mxu0 0.0
  %105 = vmatprep.subr.mxu0 0.0
  %106 = vmatpush1.msra.mxu0 0.0
  %107 = vmatprep.mubr.f32.mxu0 0.0
  %v108 = vand.u32 %v34, 4294901760
  %v109 = vsub.f32 %v34, %v108
  %v110 = vand.u32 %v109, 4294901760
  %v111 = vsub.f32 %v109, %v110
  %v112 = vand.u32 %v111, 4294901760
  %113 = vmatmul.mubr.f32.gmra.mrb[0].mxu0 %v112
  %v114 = vpop.f32.mrb[0].mxu0
  %v115 = vadd.f32 %v28, %v114
  %v116 = vpop.f32.mrb[0].mxu0
  %v117 = vadd.f32 %v28, %v116
  %118 = vdwg.mxu0
  %v119 = vand.u32 %v39, 4294901760
  %v120 = vsub.f32 %v39, %v119
  %v121 = vand.u32 %v120, 4294901760
  %v122 = vsub.f32 %v120, %v121
  %v123 = vand.u32 %v122, 4294901760
  %124 = vmatprep.subr.mxu0 %v123
  %v125 = vand.u32 %v37, 4294901760
  %v126 = vsub.f32 %v37, %v125
  %v127 = vand.u32 %v126, 4294901760
  %v128 = vsub.f32 %v126, %v127
  %v129 = vand.u32 %v128, 4294901760
  %130 = vmatpush1.msra.mxu0 %v129
  %131 = vmatprep.subr.mxu0 0.0
  %132 = vmatpush1.msra.mxu0 0.0
  %133 = vmatprep.subr.mxu0 0.0
  %134 = vmatpush1.msra.mxu0 0.0
  %135 = vmatprep.subr.mxu0 0.0
  %136 = vmatpush1.msra.mxu0 0.0
  %137 = vmatprep.subr.mxu0 0.0
  %138 = vmatpush1.msra.mxu0 0.0
  %139 = vmatprep.subr.mxu0 0.0
  %140 = vmatpush1.msra.mxu0 0.0
  %141 = vmatprep.subr.mxu0 0.0
  %142 = vmatpush1.msra.mxu0 0.0
  %143 = vmatprep.subr.mxu0 0.0
  %144 = vmatpush1.msra.mxu0 0.0
  %145 = vmatprep.subr.mxu0 0.0
  %146 = vmatpush1.msra.mxu0 0.0
  %147 = vmatprep.subr.mxu0 0.0
  %148 = vmatpush1.msra.mxu0 0.0
  %149 = vmatprep.subr.mxu0 0.0
  %150 = vmatpush1.msra.mxu0 0.0
  %151 = vmatprep.subr.mxu0 0.0
  %152 = vmatpush1.msra.mxu0 0.0
  %153 = vmatprep.subr.mxu0 0.0
  %154 = vmatpush1.msra.mxu0 0.0
  %155 = vmatprep.subr.mxu0 0.0
  %156 = vmatpush1.msra.mxu0 0.0
  %157 = vmatprep.subr.mxu0 0.0
  %158 = vmatpush1.msra.mxu0 0.0
  %159 = vmatprep.subr.mxu0 0.0
  %160 = vmatpush1.msra.mxu0 0.0
  %161 = vmatprep.subr.mxu0 0.0
  %162 = vmatpush1.msra.mxu0 0.0
  %163 = vmatprep.subr.mxu0 0.0
  %164 = vmatpush1.msra.mxu0 0.0
  %165 = vmatprep.subr.mxu0 0.0
  %166 = vmatpush1.msra.mxu0 0.0
  %167 = vmatprep.subr.mxu0 0.0
  %168 = vmatpush1.msra.mxu0 0.0
  %169 = vmatprep.subr.mxu0 0.0
  %170 = vmatpush1.msra.mxu0 0.0
  %171 = vmatprep.subr.mxu0 0.0
  %172 = vmatpush1.msra.mxu0 0.0
  %173 = vmatprep.subr.mxu0 0.0
  %174 = vmatpush1.msra.mxu0 0.0
  %175 = vmatprep.subr.mxu0 0.0
  %176 = vmatpush1.msra.mxu0 0.0
  %177 = vmatprep.subr.mxu0 0.0
  %178 = vmatpush1.msra.mxu0 0.0
  %179 = vmatprep.subr.mxu0 0.0
  %180 = vmatpush1.msra.mxu0 0.0
  %181 = vmatprep.subr.mxu0 0.0
  %182 = vmatpush1.msra.mxu0 0.0
  %183 = vmatprep.subr.mxu0 0.0
  %184 = vmatpush1.msra.mxu0 0.0
  %185 = vmatprep.subr.mxu0 0.0
  %186 = vmatpush1.msra.mxu0 0.0
  %187 = vmatprep.subr.mxu0 0.0
  %188 = vmatpush1.msra.mxu0 0.0
  %189 = vmatprep.subr.mxu0 0.0
  %190 = vmatpush1.msra.mxu0 0.0
  %191 = vmatprep.subr.mxu0 0.0
  %192 = vmatpush1.msra.mxu0 0.0
  %193 = vmatprep.mubr.f32.mxu0 0.0
  %v194 = vand.u32 %v34, 4294901760
  %195 = vmatmul.mubr.f32.gmra.mrb[0].mxu0 %v194
  %v196 = vpop.f32.mrb[0].mxu0
  %v197 = vadd.f32 %v115, %v196
  %v198 = vpop.f32.mrb[0].mxu0
  %v199 = vadd.f32 %v117, %v198
  %200 = vdwg.mxu0
  %v201 = vand.u32 %v39, 4294901760
  %v202 = vsub.f32 %v39, %v201
  %203 = vmatprep.subr.mxu0 %v202
  %v204 = vand.u32 %v37, 4294901760
  %v205 = vsub.f32 %v37, %v204
  %206 = vmatpush1.msra.mxu0 %v205
  %207 = vmatprep.subr.mxu0 0.0
  %208 = vmatpush1.msra.mxu0 0.0
  %209 = vmatprep.subr.mxu0 0.0
  %210 = vmatpush1.msra.mxu0 0.0
  %211 = vmatprep.subr.mxu0 0.0
  %212 = vmatpush1.msra.mxu0 0.0
  %213 = vmatprep.subr.mxu0 0.0
  %214 = vmatpush1.msra.mxu0 0.0
  %215 = vmatprep.subr.mxu0 0.0
  %216 = vmatpush1.msra.mxu0 0.0
  %217 = vmatprep.subr.mxu0 0.0
  %218 = vmatpush1.msra.mxu0 0.0
  %219 = vmatprep.subr.mxu0 0.0
  %220 = vmatpush1.msra.mxu0 0.0
  %221 = vmatprep.subr.mxu0 0.0
  %222 = vmatpush1.msra.mxu0 0.0
  %223 = vmatprep.subr.mxu0 0.0
  %224 = vmatpush1.msra.mxu0 0.0
  %225 = vmatprep.subr.mxu0 0.0
  %226 = vmatpush1.msra.mxu0 0.0
  %227 = vmatprep.subr.mxu0 0.0
  %228 = vmatpush1.msra.mxu0 0.0
  %229 = vmatprep.subr.mxu0 0.0
  %230 = vmatpush1.msra.mxu0 0.0
  %231 = vmatprep.subr.mxu0 0.0
  %232 = vmatpush1.msra.mxu0 0.0
  %233 = vmatprep.subr.mxu0 0.0
  %234 = vmatpush1.msra.mxu0 0.0
  %235 = vmatprep.subr.mxu0 0.0
  %236 = vmatpush1.msra.mxu0 0.0
  %237 = vmatprep.subr.mxu0 0.0
  %238 = vmatpush1.msra.mxu0 0.0
  %239 = vmatprep.subr.mxu0 0.0
  %240 = vmatpush1.msra.mxu0 0.0
  %241 = vmatprep.subr.mxu0 0.0
  %242 = vmatpush1.msra.mxu0 0.0
  %243 = vmatprep.subr.mxu0 0.0
  %244 = vmatpush1.msra.mxu0 0.0
  %245 = vmatprep.subr.mxu0 0.0
  %246 = vmatpush1.msra.mxu0 0.0
  %247 = vmatprep.subr.mxu0 0.0
  %248 = vmatpush1.msra.mxu0 0.0
  %249 = vmatprep.subr.mxu0 0.0
  %250 = vmatpush1.msra.mxu0 0.0
  %251 = vmatprep.subr.mxu0 0.0
  %252 = vmatpush1.msra.mxu0 0.0
  %253 = vmatprep.subr.mxu0 0.0
  %254 = vmatpush1.msra.mxu0 0.0
  %255 = vmatprep.subr.mxu0 0.0
  %256 = vmatpush1.msra.mxu0 0.0
  %257 = vmatprep.subr.mxu0 0.0
  %258 = vmatpush1.msra.mxu0 0.0
  %259 = vmatprep.subr.mxu0 0.0
  %260 = vmatpush1.msra.mxu0 0.0
  %261 = vmatprep.subr.mxu0 0.0
  %262 = vmatpush1.msra.mxu0 0.0
  %263 = vmatprep.subr.mxu0 0.0
  %264 = vmatpush1.msra.mxu0 0.0
  %265 = vmatprep.subr.mxu0 0.0
  %266 = vmatpush1.msra.mxu0 0.0
  %267 = vmatprep.subr.mxu0 0.0
  %268 = vmatpush1.msra.mxu0 0.0
  %269 = vmatprep.mubr.f32.mxu0 0.0
  %v270 = vand.u32 %v34, 4294901760
  %v271 = vsub.f32 %v34, %v270
  %272 = vmatmul.mubr.f32.gmra.mrb[0].mxu0 %v271
  %v273 = vpop.f32.mrb[0].mxu0
  %v274 = vadd.f32 %v197, %v273
  %v275 = vpop.f32.mrb[0].mxu0
  %v276 = vadd.f32 %v199, %v275
  %277 = vdwg.mxu0
  %v278 = vand.u32 %v39, 4294901760
  %279 = vmatprep.subr.mxu0 %v278
  %v280 = vand.u32 %v37, 4294901760
  %281 = vmatpush1.msra.mxu0 %v280
  %282 = vmatprep.subr.mxu0 0.0
  %283 = vmatpush1.msra.mxu0 0.0
  %284 = vmatprep.subr.mxu0 0.0
  %285 = vmatpush1.msra.mxu0 0.0
  %286 = vmatprep.subr.mxu0 0.0
  %287 = vmatpush1.msra.mxu0 0.0
  %288 = vmatprep.subr.mxu0 0.0
  %289 = vmatpush1.msra.mxu0 0.0
  %290 = vmatprep.subr.mxu0 0.0
  %291 = vmatpush1.msra.mxu0 0.0
  %292 = vmatprep.subr.mxu0 0.0
  %293 = vmatpush1.msra.mxu0 0.0
  %294 = vmatprep.subr.mxu0 0.0
  %295 = vmatpush1.msra.mxu0 0.0
  %296 = vmatprep.subr.mxu0 0.0
  %297 = vmatpush1.msra.mxu0 0.0
  %298 = vmatprep.subr.mxu0 0.0
  %299 = vmatpush1.msra.mxu0 0.0
  %300 = vmatprep.subr.mxu0 0.0
  %301 = vmatpush1.msra.mxu0 0.0
  %302 = vmatprep.subr.mxu0 0.0
  %303 = vmatpush1.msra.mxu0 0.0
  %304 = vmatprep.subr.mxu0 0.0
  %305 = vmatpush1.msra.mxu0 0.0
  %306 = vmatprep.subr.mxu0 0.0
  %307 = vmatpush1.msra.mxu0 0.0
  %308 = vmatprep.subr.mxu0 0.0
  %309 = vmatpush1.msra.mxu0 0.0
  %310 = vmatprep.subr.mxu0 0.0
  %311 = vmatpush1.msra.mxu0 0.0
  %312 = vmatprep.subr.mxu0 0.0
  %313 = vmatpush1.msra.mxu0 0.0
  %314 = vmatprep.subr.mxu0 0.0
  %315 = vmatpush1.msra.mxu0 0.0
  %316 = vmatprep.subr.mxu0 0.0
  %317 = vmatpush1.msra.mxu0 0.0
  %318 = vmatprep.subr.mxu0 0.0
  %319 = vmatpush1.msra.mxu0 0.0
  %320 = vmatprep.subr.mxu0 0.0
  %321 = vmatpush1.msra.mxu0 0.0
  %322 = vmatprep.subr.mxu0 0.0
  %323 = vmatpush1.msra.mxu0 0.0
  %324 = vmatprep.subr.mxu0 0.0
  %325 = vmatpush1.msra.mxu0 0.0
  %326 = vmatprep.subr.mxu0 0.0
  %327 = vmatpush1.msra.mxu0 0.0
  %328 = vmatprep.subr.mxu0 0.0
  %329 = vmatpush1.msra.mxu0 0.0
  %330 = vmatprep.subr.mxu0 0.0
  %331 = vmatpush1.msra.mxu0 0.0
  %332 = vmatprep.subr.mxu0 0.0
  %333 = vmatpush1.msra.mxu0 0.0
  %334 = vmatprep.subr.mxu0 0.0
  %335 = vmatpush1.msra.mxu0 0.0
  %336 = vmatprep.subr.mxu0 0.0
  %337 = vmatpush1.msra.mxu0 0.0
  %338 = vmatprep.subr.mxu0 0.0
  %339 = vmatpush1.msra.mxu0 0.0
  %340 = vmatprep.subr.mxu0 0.0
  %341 = vmatpush1.msra.mxu0 0.0
  %342 = vmatprep.subr.mxu0 0.0
  %343 = vmatpush1.msra.mxu0 0.0
  %344 = vmatprep.mubr.f32.mxu0 0.0
  %v345 = vand.u32 %v34, 4294901760
  %v346 = vsub.f32 %v34, %v345
  %v347 = vand.u32 %v346, 4294901760
  %348 = vmatmul.mubr.f32.gmra.mrb[0].mxu0 %v347
  %v349 = vpop.f32.mrb[0].mxu0
  %v350 = vadd.f32 %v274, %v349
  %v351 = vpop.f32.mrb[0].mxu0
  %v352 = vadd.f32 %v276, %v351
  %353 = vdwg.mxu0
  %v354 = vand.u32 %v39, 4294901760
  %v355 = vsub.f32 %v39, %v354
  %v356 = vand.u32 %v355, 4294901760
  %357 = vmatprep.subr.mxu0 %v356
  %v358 = vand.u32 %v37, 4294901760
  %v359 = vsub.f32 %v37, %v358
  %v360 = vand.u32 %v359, 4294901760
  %361 = vmatpush1.msra.mxu0 %v360
  %362 = vmatprep.subr.mxu0 0.0
  %363 = vmatpush1.msra.mxu0 0.0
  %364 = vmatprep.subr.mxu0 0.0
  %365 = vmatpush1.msra.mxu0 0.0
  %366 = vmatprep.subr.mxu0 0.0
  %367 = vmatpush1.msra.mxu0 0.0
  %368 = vmatprep.subr.mxu0 0.0
  %369 = vmatpush1.msra.mxu0 0.0
  %370 = vmatprep.subr.mxu0 0.0
  %371 = vmatpush1.msra.mxu0 0.0
  %372 = vmatprep.subr.mxu0 0.0
  %373 = vmatpush1.msra.mxu0 0.0
  %374 = vmatprep.subr.mxu0 0.0
  %375 = vmatpush1.msra.mxu0 0.0
  %376 = vmatprep.subr.mxu0 0.0
  %377 = vmatpush1.msra.mxu0 0.0
  %378 = vmatprep.subr.mxu0 0.0
  %379 = vmatpush1.msra.mxu0 0.0
  %380 = vmatprep.subr.mxu0 0.0
  %381 = vmatpush1.msra.mxu0 0.0
  %382 = vmatprep.subr.mxu0 0.0
  %383 = vmatpush1.msra.mxu0 0.0
  %384 = vmatprep.subr.mxu0 0.0
  %385 = vmatpush1.msra.mxu0 0.0
  %386 = vmatprep.subr.mxu0 0.0
  %387 = vmatpush1.msra.mxu0 0.0
  %388 = vmatprep.subr.mxu0 0.0
  %389 = vmatpush1.msra.mxu0 0.0
  %390 = vmatprep.subr.mxu0 0.0
  %391 = vmatpush1.msra.mxu0 0.0
  %392 = vmatprep.subr.mxu0 0.0
  %393 = vmatpush1.msra.mxu0 0.0
  %394 = vmatprep.subr.mxu0 0.0
  %395 = vmatpush1.msra.mxu0 0.0
  %396 = vmatprep.subr.mxu0 0.0
  %397 = vmatpush1.msra.mxu0 0.0
  %398 = vmatprep.subr.mxu0 0.0
  %399 = vmatpush1.msra.mxu0 0.0
  %400 = vmatprep.subr.mxu0 0.0
  %401 = vmatpush1.msra.mxu0 0.0
  %402 = vmatprep.subr.mxu0 0.0
  %403 = vmatpush1.msra.mxu0 0.0
  %404 = vmatprep.subr.mxu0 0.0
  %405 = vmatpush1.msra.mxu0 0.0
  %406 = vmatprep.subr.mxu0 0.0
  %407 = vmatpush1.msra.mxu0 0.0
  %408 = vmatprep.subr.mxu0 0.0
  %409 = vmatpush1.msra.mxu0 0.0
  %410 = vmatprep.subr.mxu0 0.0
  %411 = vmatpush1.msra.mxu0 0.0
  %412 = vmatprep.subr.mxu0 0.0
  %413 = vmatpush1.msra.mxu0 0.0
  %414 = vmatprep.subr.mxu0 0.0
  %415 = vmatpush1.msra.mxu0 0.0
  %416 = vmatprep.subr.mxu0 0.0
  %417 = vmatpush1.msra.mxu0 0.0
  %418 = vmatprep.subr.mxu0 0.0
  %419 = vmatpush1.msra.mxu0 0.0
  %420 = vmatprep.subr.mxu0 0.0
  %421 = vmatpush1.msra.mxu0 0.0
  %422 = vmatprep.subr.mxu0 0.0
  %423 = vmatpush1.msra.mxu0 0.0
  %424 = vmatprep.mubr.f32.mxu0 0.0
  %v425 = vand.u32 %v34, 4294901760
  %426 = vmatmul.mubr.f32.gmra.mrb[0].mxu0 %v425
  %v427 = vpop.f32.mrb[0].mxu0
  %v428 = vadd.f32 %v350, %v427
  %v429 = vpop.f32.mrb[0].mxu0
  %v430 = vadd.f32 %v352, %v429
  %431 = vdwg.mxu0
  %v432 = vand.u32 %v39, 4294901760
  %433 = vmatprep.subr.mxu0 %v432
  %v434 = vand.u32 %v37, 4294901760
  %435 = vmatpush1.msra.mxu0 %v434
  %436 = vmatprep.subr.mxu0 0.0
  %437 = vmatpush1.msra.mxu0 0.0
  %438 = vmatprep.subr.mxu0 0.0
  %439 = vmatpush1.msra.mxu0 0.0
  %440 = vmatprep.subr.mxu0 0.0
  %441 = vmatpush1.msra.mxu0 0.0
  %442 = vmatprep.subr.mxu0 0.0
  %443 = vmatpush1.msra.mxu0 0.0
  %444 = vmatprep.subr.mxu0 0.0
  %445 = vmatpush1.msra.mxu0 0.0
  %446 = vmatprep.subr.mxu0 0.0
  %447 = vmatpush1.msra.mxu0 0.0
  %448 = vmatprep.subr.mxu0 0.0
  %449 = vmatpush1.msra.mxu0 0.0
  %450 = vmatprep.subr.mxu0 0.0
  %451 = vmatpush1.msra.mxu0 0.0
  %452 = vmatprep.subr.mxu0 0.0
  %453 = vmatpush1.msra.mxu0 0.0
  %454 = vmatprep.subr.mxu0 0.0
  %455 = vmatpush1.msra.mxu0 0.0
  %456 = vmatprep.subr.mxu0 0.0
  %457 = vmatpush1.msra.mxu0 0.0
  %458 = vmatprep.subr.mxu0 0.0
  %459 = vmatpush1.msra.mxu0 0.0
  %460 = vmatprep.subr.mxu0 0.0
  %461 = vmatpush1.msra.mxu0 0.0
  %462 = vmatprep.subr.mxu0 0.0
  %463 = vmatpush1.msra.mxu0 0.0
  %464 = vmatprep.subr.mxu0 0.0
  %465 = vmatpush1.msra.mxu0 0.0
  %466 = vmatprep.subr.mxu0 0.0
  %467 = vmatpush1.msra.mxu0 0.0
  %468 = vmatprep.subr.mxu0 0.0
  %469 = vmatpush1.msra.mxu0 0.0
  %470 = vmatprep.subr.mxu0 0.0
  %471 = vmatpush1.msra.mxu0 0.0
  %472 = vmatprep.subr.mxu0 0.0
  %473 = vmatpush1.msra.mxu0 0.0
  %474 = vmatprep.subr.mxu0 0.0
  %475 = vmatpush1.msra.mxu0 0.0
  %476 = vmatprep.subr.mxu0 0.0
  %477 = vmatpush1.msra.mxu0 0.0
  %478 = vmatprep.subr.mxu0 0.0
  %479 = vmatpush1.msra.mxu0 0.0
  %480 = vmatprep.subr.mxu0 0.0
  %481 = vmatpush1.msra.mxu0 0.0
  %482 = vmatprep.subr.mxu0 0.0
  %483 = vmatpush1.msra.mxu0 0.0
  %484 = vmatprep.subr.mxu0 0.0
  %485 = vmatpush1.msra.mxu0 0.0
  %486 = vmatprep.subr.mxu0 0.0
  %487 = vmatpush1.msra.mxu0 0.0
  %488 = vmatprep.subr.mxu0 0.0
  %489 = vmatpush1.msra.mxu0 0.0
  %490 = vmatprep.subr.mxu0 0.0
  %491 = vmatpush1.msra.mxu0 0.0
  %492 = vmatprep.subr.mxu0 0.0
  %493 = vmatpush1.msra.mxu0 0.0
  %494 = vmatprep.subr.mxu0 0.0
  %495 = vmatpush1.msra.mxu0 0.0
  %496 = vmatprep.subr.mxu0 0.0
  %497 = vmatpush1.msra.mxu0 0.0
  %498 = vmatprep.mubr.f32.mxu0 0.0
  %v499 = vand.u32 %v34, 4294901760
  %500 = vmatmul.mubr.f32.gmra.mrb[0].mxu0 %v499
  %v501 = vpop.f32.mrb[0].mxu0
  %v502 = vadd.f32 %v428, %v501
  %v503 = vpop.f32.mrb[0].mxu0
  %v504 = vadd.f32 %v430, %v503
  %505 = vdwg.mxu0
  %v506 = vmax.f32 %v502, -60.0
  %v507 = vmax.f32 %v504, -60.0
  %v508 = vsub.f32 0.0, %v506
  %v509 = vsub.f32 0.0, %v507
  %v510 = vmul.f32 %v508, 1.442695
  %v511 = vpow.pop %v510
  %v512 = vmul.f32 %v509, 1.442695
  %v513 = vpow.pop %v512
  %v514 = vadd.f32 %v511, 1.0
  %v515 = vadd.f32 %v513, 1.0
  %v516 = vrcp.pop %v514
  %v517 = vrcp.pop %v515
  %v518 = vmul.f32 %v514, %v516
  %v519 = vmul.f32 %v515, %v517
  %v520 = vsub.f32 2.0, %v518
  %v521 = vsub.f32 2.0, %v519
  %v522 = vmul.f32 %v516, %v520
  %v523 = vmul.f32 %v517, %v521
  %525 = vset.pattern.permute.xlu0 0
  %526 = vperm.xlu0 %525, %v23
  %v527 = vpop.permute.xlu0 %526
  %v530 = vsel %vm32, %v22, 0
  %v533 = vsel %vm36, %v522, 0
  %v536 = vsel %vm36, %v523, 0
  %v538 = vand.u32 %v536, 4294901760
  %539 = vmatprep.subr.mxu0 %v538
  %v540 = vand.u32 %v533, 4294901760
  %541 = vmatpush1.msra.mxu0 %v540
  %542 = vmatprep.subr.mxu0 0.0
  %543 = vmatpush1.msra.mxu0 0.0
  %544 = vmatprep.subr.mxu0 0.0
  %545 = vmatpush1.msra.mxu0 0.0
  %546 = vmatprep.subr.mxu0 0.0
  %547 = vmatpush1.msra.mxu0 0.0
  %548 = vmatprep.subr.mxu0 0.0
  %549 = vmatpush1.msra.mxu0 0.0
  %550 = vmatprep.subr.mxu0 0.0
  %551 = vmatpush1.msra.mxu0 0.0
  %552 = vmatprep.subr.mxu0 0.0
  %553 = vmatpush1.msra.mxu0 0.0
  %554 = vmatprep.subr.mxu0 0.0
  %555 = vmatpush1.msra.mxu0 0.0
  %556 = vmatprep.subr.mxu0 0.0
  %557 = vmatpush1.msra.mxu0 0.0
  %558 = vmatprep.subr.mxu0 0.0
  %559 = vmatpush1.msra.mxu0 0.0
  %560 = vmatprep.subr.mxu0 0.0
  %561 = vmatpush1.msra.mxu0 0.0
  %562 = vmatprep.subr.mxu0 0.0
  %563 = vmatpush1.msra.mxu0 0.0
  %564 = vmatprep.subr.mxu0 0.0
  %565 = vmatpush1.msra.mxu0 0.0
  %566 = vmatprep.subr.mxu0 0.0
  %567 = vmatpush1.msra.mxu0 0.0
  %568 = vmatprep.subr.mxu0 0.0
  %569 = vmatpush1.msra.mxu0 0.0
  %570 = vmatprep.subr.mxu0 0.0
  %571 = vmatpush1.msra.mxu0 0.0
  %572 = vmatprep.subr.mxu0 0.0
  %573 = vmatpush1.msra.mxu0 0.0
  %574 = vmatprep.subr.mxu0 0.0
  %575 = vmatpush1.msra.mxu0 0.0
  %576 = vmatprep.subr.mxu0 0.0
  %577 = vmatpush1.msra.mxu0 0.0
  %578 = vmatprep.subr.mxu0 0.0
  %579 = vmatpush1.msra.mxu0 0.0
  %580 = vmatprep.subr.mxu0 0.0
  %581 = vmatpush1.msra.mxu0 0.0
  %582 = vmatprep.subr.mxu0 0.0
  %583 = vmatpush1.msra.mxu0 0.0
  %584 = vmatprep.subr.mxu0 0.0
  %585 = vmatpush1.msra.mxu0 0.0
  %586 = vmatprep.subr.mxu0 0.0
  %587 = vmatpush1.msra.mxu0 0.0
  %588 = vmatprep.subr.mxu0 0.0
  %589 = vmatpush1.msra.mxu0 0.0
  %590 = vmatprep.subr.mxu0 0.0
  %591 = vmatpush1.msra.mxu0 0.0
  %592 = vmatprep.subr.mxu0 0.0
  %593 = vmatpush1.msra.mxu0 0.0
  %594 = vmatprep.subr.mxu0 0.0
  %595 = vmatpush1.msra.mxu0 0.0
  %596 = vmatprep.subr.mxu0 0.0
  %597 = vmatpush1.msra.mxu0 0.0
  %598 = vmatprep.subr.mxu0 0.0
  %599 = vmatpush1.msra.mxu0 0.0
  %600 = vmatprep.subr.mxu0 0.0
  %601 = vmatpush1.msra.mxu0 0.0
  %602 = vmatprep.subr.mxu0 0.0
  %603 = vmatpush1.msra.mxu0 0.0
  %604 = vmatprep.mubr.f32.mxu0 0.0
  %v605 = vand.u32 %v530, 4294901760
  %v606 = vsub.f32 %v530, %v605
  %v607 = vand.u32 %v606, 4294901760
  %v608 = vsub.f32 %v606, %v607
  %v609 = vand.u32 %v608, 4294901760
  %610 = vmatmul.mubr.f32.gmra.mrb[0].mxu0 %v609
  %v611 = vpop.f32.mrb[0].mxu0
  %v612 = vadd.f32 %v527, %v611
  %v613 = vpop.f32.mrb[0].mxu0
  %v614 = vadd.f32 %v527, %v613
  %615 = vdwg.mxu0
  %v616 = vand.u32 %v536, 4294901760
  %v617 = vsub.f32 %v536, %v616
  %v618 = vand.u32 %v617, 4294901760
  %v619 = vsub.f32 %v617, %v618
  %v620 = vand.u32 %v619, 4294901760
  %621 = vmatprep.subr.mxu0 %v620
  %v622 = vand.u32 %v533, 4294901760
  %v623 = vsub.f32 %v533, %v622
  %v624 = vand.u32 %v623, 4294901760
  %v625 = vsub.f32 %v623, %v624
  %v626 = vand.u32 %v625, 4294901760
  %627 = vmatpush1.msra.mxu0 %v626
  %628 = vmatprep.subr.mxu0 0.0
  %629 = vmatpush1.msra.mxu0 0.0
  %630 = vmatprep.subr.mxu0 0.0
  %631 = vmatpush1.msra.mxu0 0.0
  %632 = vmatprep.subr.mxu0 0.0
  %633 = vmatpush1.msra.mxu0 0.0
  %634 = vmatprep.subr.mxu0 0.0
  %635 = vmatpush1.msra.mxu0 0.0
  %636 = vmatprep.subr.mxu0 0.0
  %637 = vmatpush1.msra.mxu0 0.0
  %638 = vmatprep.subr.mxu0 0.0
  %639 = vmatpush1.msra.mxu0 0.0
  %640 = vmatprep.subr.mxu0 0.0
  %641 = vmatpush1.msra.mxu0 0.0
  %642 = vmatprep.subr.mxu0 0.0
  %643 = vmatpush1.msra.mxu0 0.0
  %644 = vmatprep.subr.mxu0 0.0
  %645 = vmatpush1.msra.mxu0 0.0
  %646 = vmatprep.subr.mxu0 0.0
  %647 = vmatpush1.msra.mxu0 0.0
  %648 = vmatprep.subr.mxu0 0.0
  %649 = vmatpush1.msra.mxu0 0.0
  %650 = vmatprep.subr.mxu0 0.0
  %651 = vmatpush1.msra.mxu0 0.0
  %652 = vmatprep.subr.mxu0 0.0
  %653 = vmatpush1.msra.mxu0 0.0
  %654 = vmatprep.subr.mxu0 0.0
  %655 = vmatpush1.msra.mxu0 0.0
  %656 = vmatprep.subr.mxu0 0.0
  %657 = vmatpush1.msra.mxu0 0.0
  %658 = vmatprep.subr.mxu0 0.0
  %659 = vmatpush1.msra.mxu0 0.0
  %660 = vmatprep.subr.mxu0 0.0
  %661 = vmatpush1.msra.mxu0 0.0
  %662 = vmatprep.subr.mxu0 0.0
  %663 = vmatpush1.msra.mxu0 0.0
  %664 = vmatprep.subr.mxu0 0.0
  %665 = vmatpush1.msra.mxu0 0.0
  %666 = vmatprep.subr.mxu0 0.0
  %667 = vmatpush1.msra.mxu0 0.0
  %668 = vmatprep.subr.mxu0 0.0
  %669 = vmatpush1.msra.mxu0 0.0
  %670 = vmatprep.subr.mxu0 0.0
  %671 = vmatpush1.msra.mxu0 0.0
  %672 = vmatprep.subr.mxu0 0.0
  %673 = vmatpush1.msra.mxu0 0.0
  %674 = vmatprep.subr.mxu0 0.0
  %675 = vmatpush1.msra.mxu0 0.0
  %676 = vmatprep.subr.mxu0 0.0
  %677 = vmatpush1.msra.mxu0 0.0
  %678 = vmatprep.subr.mxu0 0.0
  %679 = vmatpush1.msra.mxu0 0.0
  %680 = vmatprep.subr.mxu0 0.0
  %681 = vmatpush1.msra.mxu0 0.0
  %682 = vmatprep.subr.mxu0 0.0
  %683 = vmatpush1.msra.mxu0 0.0
  %684 = vmatprep.subr.mxu0 0.0
  %685 = vmatpush1.msra.mxu0 0.0
  %686 = vmatprep.subr.mxu0 0.0
  %687 = vmatpush1.msra.mxu0 0.0
  %688 = vmatprep.subr.mxu0 0.0
  %689 = vmatpush1.msra.mxu0 0.0
  %690 = vmatprep.mubr.f32.mxu0 0.0
  %v691 = vand.u32 %v530, 4294901760
  %692 = vmatmul.mubr.f32.gmra.mrb[0].mxu0 %v691
  %v693 = vpop.f32.mrb[0].mxu0
  %v694 = vadd.f32 %v612, %v693
  %v695 = vpop.f32.mrb[0].mxu0
  %v696 = vadd.f32 %v614, %v695
  %697 = vdwg.mxu0
  %v698 = vand.u32 %v536, 4294901760
  %v699 = vsub.f32 %v536, %v698
  %700 = vmatprep.subr.mxu0 %v699
  %v701 = vand.u32 %v533, 4294901760
  %v702 = vsub.f32 %v533, %v701
  %703 = vmatpush1.msra.mxu0 %v702
  %704 = vmatprep.subr.mxu0 0.0
  %705 = vmatpush1.msra.mxu0 0.0
  %706 = vmatprep.subr.mxu0 0.0
  %707 = vmatpush1.msra.mxu0 0.0
  %708 = vmatprep.subr.mxu0 0.0
  %709 = vmatpush1.msra.mxu0 0.0
  %710 = vmatprep.subr.mxu0 0.0
  %711 = vmatpush1.msra.mxu0 0.0
  %712 = vmatprep.subr.mxu0 0.0
  %713 = vmatpush1.msra.mxu0 0.0
  %714 = vmatprep.subr.mxu0 0.0
  %715 = vmatpush1.msra.mxu0 0.0
  %716 = vmatprep.subr.mxu0 0.0
  %717 = vmatpush1.msra.mxu0 0.0
  %718 = vmatprep.subr.mxu0 0.0
  %719 = vmatpush1.msra.mxu0 0.0
  %720 = vmatprep.subr.mxu0 0.0
  %721 = vmatpush1.msra.mxu0 0.0
  %722 = vmatprep.subr.mxu0 0.0
  %723 = vmatpush1.msra.mxu0 0.0
  %724 = vmatprep.subr.mxu0 0.0
  %725 = vmatpush1.msra.mxu0 0.0
  %726 = vmatprep.subr.mxu0 0.0
  %727 = vmatpush1.msra.mxu0 0.0
  %728 = vmatprep.subr.mxu0 0.0
  %729 = vmatpush1.msra.mxu0 0.0
  %730 = vmatprep.subr.mxu0 0.0
  %731 = vmatpush1.msra.mxu0 0.0
  %732 = vmatprep.subr.mxu0 0.0
  %733 = vmatpush1.msra.mxu0 0.0
  %734 = vmatprep.subr.mxu0 0.0
  %735 = vmatpush1.msra.mxu0 0.0
  %736 = vmatprep.subr.mxu0 0.0
  %737 = vmatpush1.msra.mxu0 0.0
  %738 = vmatprep.subr.mxu0 0.0
  %739 = vmatpush1.msra.mxu0 0.0
  %740 = vmatprep.subr.mxu0 0.0
  %741 = vmatpush1.msra.mxu0 0.0
  %742 = vmatprep.subr.mxu0 0.0
  %743 = vmatpush1.msra.mxu0 0.0
  %744 = vmatprep.subr.mxu0 0.0
  %745 = vmatpush1.msra.mxu0 0.0
  %746 = vmatprep.subr.mxu0 0.0
  %747 = vmatpush1.msra.mxu0 0.0
  %748 = vmatprep.subr.mxu0 0.0
  %749 = vmatpush1.msra.mxu0 0.0
  %750 = vmatprep.subr.mxu0 0.0
  %751 = vmatpush1.msra.mxu0 0.0
  %752 = vmatprep.subr.mxu0 0.0
  %753 = vmatpush1.msra.mxu0 0.0
  %754 = vmatprep.subr.mxu0 0.0
  %755 = vmatpush1.msra.mxu0 0.0
  %756 = vmatprep.subr.mxu0 0.0
  %757 = vmatpush1.msra.mxu0 0.0
  %758 = vmatprep.subr.mxu0 0.0
  %759 = vmatpush1.msra.mxu0 0.0
  %760 = vmatprep.subr.mxu0 0.0
  %761 = vmatpush1.msra.mxu0 0.0
  %762 = vmatprep.subr.mxu0 0.0
  %763 = vmatpush1.msra.mxu0 0.0
  %764 = vmatprep.subr.mxu0 0.0
  %765 = vmatpush1.msra.mxu0 0.0
  %766 = vmatprep.mubr.f32.mxu0 0.0
  %v767 = vand.u32 %v530, 4294901760
  %v768 = vsub.f32 %v530, %v767
  %769 = vmatmul.mubr.f32.gmra.mrb[0].mxu0 %v768
  %v770 = vpop.f32.mrb[0].mxu0
  %v771 = vadd.f32 %v694, %v770
  %v772 = vpop.f32.mrb[0].mxu0
  %v773 = vadd.f32 %v696, %v772
  %774 = vdwg.mxu0
  %v775 = vand.u32 %v536, 4294901760
  %776 = vmatprep.subr.mxu0 %v775
  %v777 = vand.u32 %v533, 4294901760
  %778 = vmatpush1.msra.mxu0 %v777
  %779 = vmatprep.subr.mxu0 0.0
  %780 = vmatpush1.msra.mxu0 0.0
  %781 = vmatprep.subr.mxu0 0.0
  %782 = vmatpush1.msra.mxu0 0.0
  %783 = vmatprep.subr.mxu0 0.0
  %784 = vmatpush1.msra.mxu0 0.0
  %785 = vmatprep.subr.mxu0 0.0
  %786 = vmatpush1.msra.mxu0 0.0
  %787 = vmatprep.subr.mxu0 0.0
  %788 = vmatpush1.msra.mxu0 0.0
  %789 = vmatprep.subr.mxu0 0.0
  %790 = vmatpush1.msra.mxu0 0.0
  %791 = vmatprep.subr.mxu0 0.0
  %792 = vmatpush1.msra.mxu0 0.0
  %793 = vmatprep.subr.mxu0 0.0
  %794 = vmatpush1.msra.mxu0 0.0
  %795 = vmatprep.subr.mxu0 0.0
  %796 = vmatpush1.msra.mxu0 0.0
  %797 = vmatprep.subr.mxu0 0.0
  %798 = vmatpush1.msra.mxu0 0.0
  %799 = vmatprep.subr.mxu0 0.0
  %800 = vmatpush1.msra.mxu0 0.0
  %801 = vmatprep.subr.mxu0 0.0
  %802 = vmatpush1.msra.mxu0 0.0
  %803 = vmatprep.subr.mxu0 0.0
  %804 = vmatpush1.msra.mxu0 0.0
  %805 = vmatprep.subr.mxu0 0.0
  %806 = vmatpush1.msra.mxu0 0.0
  %807 = vmatprep.subr.mxu0 0.0
  %808 = vmatpush1.msra.mxu0 0.0
  %809 = vmatprep.subr.mxu0 0.0
  %810 = vmatpush1.msra.mxu0 0.0
  %811 = vmatprep.subr.mxu0 0.0
  %812 = vmatpush1.msra.mxu0 0.0
  %813 = vmatprep.subr.mxu0 0.0
  %814 = vmatpush1.msra.mxu0 0.0
  %815 = vmatprep.subr.mxu0 0.0
  %816 = vmatpush1.msra.mxu0 0.0
  %817 = vmatprep.subr.mxu0 0.0
  %818 = vmatpush1.msra.mxu0 0.0
  %819 = vmatprep.subr.mxu0 0.0
  %820 = vmatpush1.msra.mxu0 0.0
  %821 = vmatprep.subr.mxu0 0.0
  %822 = vmatpush1.msra.mxu0 0.0
  %823 = vmatprep.subr.mxu0 0.0
  %824 = vmatpush1.msra.mxu0 0.0
  %825 = vmatprep.subr.mxu0 0.0
  %826 = vmatpush1.msra.mxu0 0.0
  %827 = vmatprep.subr.mxu0 0.0
  %828 = vmatpush1.msra.mxu0 0.0
  %829 = vmatprep.subr.mxu0 0.0
  %830 = vmatpush1.msra.mxu0 0.0
  %831 = vmatprep.subr.mxu0 0.0
  %832 = vmatpush1.msra.mxu0 0.0
  %833 = vmatprep.subr.mxu0 0.0
  %834 = vmatpush1.msra.mxu0 0.0
  %835 = vmatprep.subr.mxu0 0.0
  %836 = vmatpush1.msra.mxu0 0.0
  %837 = vmatprep.subr.mxu0 0.0
  %838 = vmatpush1.msra.mxu0 0.0
  %839 = vmatprep.subr.mxu0 0.0
  %840 = vmatpush1.msra.mxu0 0.0
  %841 = vmatprep.mubr.f32.mxu0 0.0
  %v842 = vand.u32 %v530, 4294901760
  %v843 = vsub.f32 %v530, %v842
  %v844 = vand.u32 %v843, 4294901760
  %845 = vmatmul.mubr.f32.gmra.mrb[0].mxu0 %v844
  %v846 = vpop.f32.mrb[0].mxu0
  %v847 = vadd.f32 %v771, %v846
  %v848 = vpop.f32.mrb[0].mxu0
  %v849 = vadd.f32 %v773, %v848
  %850 = vdwg.mxu0
  %v851 = vand.u32 %v536, 4294901760
  %v852 = vsub.f32 %v536, %v851
  %v853 = vand.u32 %v852, 4294901760
  %854 = vmatprep.subr.mxu0 %v853
  %v855 = vand.u32 %v533, 4294901760
  %v856 = vsub.f32 %v533, %v855
  %v857 = vand.u32 %v856, 4294901760
  %858 = vmatpush1.msra.mxu0 %v857
  %859 = vmatprep.subr.mxu0 0.0
  %860 = vmatpush1.msra.mxu0 0.0
  %861 = vmatprep.subr.mxu0 0.0
  %862 = vmatpush1.msra.mxu0 0.0
  %863 = vmatprep.subr.mxu0 0.0
  %864 = vmatpush1.msra.mxu0 0.0
  %865 = vmatprep.subr.mxu0 0.0
  %866 = vmatpush1.msra.mxu0 0.0
  %867 = vmatprep.subr.mxu0 0.0
  %868 = vmatpush1.msra.mxu0 0.0
  %869 = vmatprep.subr.mxu0 0.0
  %870 = vmatpush1.msra.mxu0 0.0
  %871 = vmatprep.subr.mxu0 0.0
  %872 = vmatpush1.msra.mxu0 0.0
  %873 = vmatprep.subr.mxu0 0.0
  %874 = vmatpush1.msra.mxu0 0.0
  %875 = vmatprep.subr.mxu0 0.0
  %876 = vmatpush1.msra.mxu0 0.0
  %877 = vmatprep.subr.mxu0 0.0
  %878 = vmatpush1.msra.mxu0 0.0
  %879 = vmatprep.subr.mxu0 0.0
  %880 = vmatpush1.msra.mxu0 0.0
  %881 = vmatprep.subr.mxu0 0.0
  %882 = vmatpush1.msra.mxu0 0.0
  %883 = vmatprep.subr.mxu0 0.0
  %884 = vmatpush1.msra.mxu0 0.0
  %885 = vmatprep.subr.mxu0 0.0
  %886 = vmatpush1.msra.mxu0 0.0
  %887 = vmatprep.subr.mxu0 0.0
  %888 = vmatpush1.msra.mxu0 0.0
  %889 = vmatprep.subr.mxu0 0.0
  %890 = vmatpush1.msra.mxu0 0.0
  %891 = vmatprep.subr.mxu0 0.0
  %892 = vmatpush1.msra.mxu0 0.0
  %893 = vmatprep.subr.mxu0 0.0
  %894 = vmatpush1.msra.mxu0 0.0
  %895 = vmatprep.subr.mxu0 0.0
  %896 = vmatpush1.msra.mxu0 0.0
  %897 = vmatprep.subr.mxu0 0.0
  %898 = vmatpush1.msra.mxu0 0.0
  %899 = vmatprep.subr.mxu0 0.0
  %900 = vmatpush1.msra.mxu0 0.0
  %901 = vmatprep.subr.mxu0 0.0
  %902 = vmatpush1.msra.mxu0 0.0
  %903 = vmatprep.subr.mxu0 0.0
  %904 = vmatpush1.msra.mxu0 0.0
  %905 = vmatprep.subr.mxu0 0.0
  %906 = vmatpush1.msra.mxu0 0.0
  %907 = vmatprep.subr.mxu0 0.0
  %908 = vmatpush1.msra.mxu0 0.0
  %909 = vmatprep.subr.mxu0 0.0
  %910 = vmatpush1.msra.mxu0 0.0
  %911 = vmatprep.subr.mxu0 0.0
  %912 = vmatpush1.msra.mxu0 0.0
  %913 = vmatprep.subr.mxu0 0.0
  %914 = vmatpush1.msra.mxu0 0.0
  %915 = vmatprep.subr.mxu0 0.0
  %916 = vmatpush1.msra.mxu0 0.0
  %917 = vmatprep.subr.mxu0 0.0
  %918 = vmatpush1.msra.mxu0 0.0
  %919 = vmatprep.subr.mxu0 0.0
  %920 = vmatpush1.msra.mxu0 0.0
  %921 = vmatprep.mubr.f32.mxu0 0.0
  %v922 = vand.u32 %v530, 4294901760
  %923 = vmatmul.mubr.f32.gmra.mrb[0].mxu0 %v922
  %v924 = vpop.f32.mrb[0].mxu0
  %v925 = vadd.f32 %v847, %v924
  %v926 = vpop.f32.mrb[0].mxu0
  %v927 = vadd.f32 %v849, %v926
  %928 = vdwg.mxu0
  %v929 = vand.u32 %v536, 4294901760
  %930 = vmatprep.subr.mxu0 %v929
  %v931 = vand.u32 %v533, 4294901760
  %932 = vmatpush1.msra.mxu0 %v931
  %933 = vmatprep.subr.mxu0 0.0
  %934 = vmatpush1.msra.mxu0 0.0
  %935 = vmatprep.subr.mxu0 0.0
  %936 = vmatpush1.msra.mxu0 0.0
  %937 = vmatprep.subr.mxu0 0.0
  %938 = vmatpush1.msra.mxu0 0.0
  %939 = vmatprep.subr.mxu0 0.0
  %940 = vmatpush1.msra.mxu0 0.0
  %941 = vmatprep.subr.mxu0 0.0
  %942 = vmatpush1.msra.mxu0 0.0
  %943 = vmatprep.subr.mxu0 0.0
  %944 = vmatpush1.msra.mxu0 0.0
  %945 = vmatprep.subr.mxu0 0.0
  %946 = vmatpush1.msra.mxu0 0.0
  %947 = vmatprep.subr.mxu0 0.0
  %948 = vmatpush1.msra.mxu0 0.0
  %949 = vmatprep.subr.mxu0 0.0
  %950 = vmatpush1.msra.mxu0 0.0
  %951 = vmatprep.subr.mxu0 0.0
  %952 = vmatpush1.msra.mxu0 0.0
  %953 = vmatprep.subr.mxu0 0.0
  %954 = vmatpush1.msra.mxu0 0.0
  %955 = vmatprep.subr.mxu0 0.0
  %956 = vmatpush1.msra.mxu0 0.0
  %957 = vmatprep.subr.mxu0 0.0
  %958 = vmatpush1.msra.mxu0 0.0
  %959 = vmatprep.subr.mxu0 0.0
  %960 = vmatpush1.msra.mxu0 0.0
  %961 = vmatprep.subr.mxu0 0.0
  %962 = vmatpush1.msra.mxu0 0.0
  %963 = vmatprep.subr.mxu0 0.0
  %964 = vmatpush1.msra.mxu0 0.0
  %965 = vmatprep.subr.mxu0 0.0
  %966 = vmatpush1.msra.mxu0 0.0
  %967 = vmatprep.subr.mxu0 0.0
  %968 = vmatpush1.msra.mxu0 0.0
  %969 = vmatprep.subr.mxu0 0.0
  %970 = vmatpush1.msra.mxu0 0.0
  %971 = vmatprep.subr.mxu0 0.0
  %972 = vmatpush1.msra.mxu0 0.0
  %973 = vmatprep.subr.mxu0 0.0
  %974 = vmatpush1.msra.mxu0 0.0
  %975 = vmatprep.subr.mxu0 0.0
  %976 = vmatpush1.msra.mxu0 0.0
  %977 = vmatprep.subr.mxu0 0.0
  %978 = vmatpush1.msra.mxu0 0.0
  %979 = vmatprep.subr.mxu0 0.0
  %980 = vmatpush1.msra.mxu0 0.0
  %981 = vmatprep.subr.mxu0 0.0
  %982 = vmatpush1.msra.mxu0 0.0
  %983 = vmatprep.subr.mxu0 0.0
  %984 = vmatpush1.msra.mxu0 0.0
  %985 = vmatprep.subr.mxu0 0.0
  %986 = vmatpush1.msra.mxu0 0.0
  %987 = vmatprep.subr.mxu0 0.0
  %988 = vmatpush1.msra.mxu0 0.0
  %989 = vmatprep.subr.mxu0 0.0
  %990 = vmatpush1.msra.mxu0 0.0
  %991 = vmatprep.subr.mxu0 0.0
  %992 = vmatpush1.msra.mxu0 0.0
  %993 = vmatprep.subr.mxu0 0.0
  %994 = vmatpush1.msra.mxu0 0.0
  %995 = vmatprep.mubr.f32.mxu0 0.0
  %v996 = vand.u32 %v530, 4294901760
  %997 = vmatmul.mubr.f32.gmra.mrb[0].mxu0 %v996
  %v998 = vpop.f32.mrb[0].mxu0
  %v999 = vadd.f32 %v925, %v998
  %v1000 = vpop.f32.mrb[0].mxu0
  %v1001 = vadd.f32 %v927, %v1000
  %1002 = vdwg.mxu0
  %v1003 = vmax.f32 %v999, -60.0
  %v1004 = vmax.f32 %v1001, -60.0
  %v1005 = vsub.f32 0.0, %v1003
  %v1006 = vsub.f32 0.0, %v1004
  %v1007 = vmul.f32 %v1005, 1.442695
  %v1008 = vpow.pop %v1007
  %v1009 = vmul.f32 %v1006, 1.442695
  %v1010 = vpow.pop %v1009
  %v1011 = vadd.f32 %v1008, 1.0
  %v1012 = vadd.f32 %v1010, 1.0
  %v1013 = vrcp.pop %v1011
  %v1014 = vrcp.pop %v1012
  %v1015 = vmul.f32 %v1011, %v1013
  %v1016 = vmul.f32 %v1012, %v1014
  %v1017 = vsub.f32 2.0, %v1015
  %v1018 = vsub.f32 2.0, %v1016
  %v1019 = vmul.f32 %v1013, %v1017
  %v1020 = vmul.f32 %v1014, %v1018
  %v1023 = vcombine.low %v1019, %v1020
  %1025 = vst [vmem:[%s5] sm:$0xff] %v1023
  %s1026 = scalar_lea.vmem %s0, 8
  %v1027 = vld [vmem:[%s1026] sm:$0xff]
  %v1029 = vcombine.high %v1027, %v1027
  %v1030 = vsel %vm36, %v1027, 0
  %v1032 = vsel %vm36, %v1029, 0
  %v1034 = vand.u32 %v1032, 4294901760
  %1035 = vmatprep.subr.mxu0 %v1034
  %v1036 = vand.u32 %v1030, 4294901760
  %1037 = vmatpush1.msra.mxu0 %v1036
  %1038 = vmatprep.subr.mxu0 0.0
  %1039 = vmatpush1.msra.mxu0 0.0
  %1040 = vmatprep.subr.mxu0 0.0
  %1041 = vmatpush1.msra.mxu0 0.0
  %1042 = vmatprep.subr.mxu0 0.0
  %1043 = vmatpush1.msra.mxu0 0.0
  %1044 = vmatprep.subr.mxu0 0.0
  %1045 = vmatpush1.msra.mxu0 0.0
  %1046 = vmatprep.subr.mxu0 0.0
  %1047 = vmatpush1.msra.mxu0 0.0
  %1048 = vmatprep.subr.mxu0 0.0
  %1049 = vmatpush1.msra.mxu0 0.0
  %1050 = vmatprep.subr.mxu0 0.0
  %1051 = vmatpush1.msra.mxu0 0.0
  %1052 = vmatprep.subr.mxu0 0.0
  %1053 = vmatpush1.msra.mxu0 0.0
  %1054 = vmatprep.subr.mxu0 0.0
  %1055 = vmatpush1.msra.mxu0 0.0
  %1056 = vmatprep.subr.mxu0 0.0
  %1057 = vmatpush1.msra.mxu0 0.0
  %1058 = vmatprep.subr.mxu0 0.0
  %1059 = vmatpush1.msra.mxu0 0.0
  %1060 = vmatprep.subr.mxu0 0.0
  %1061 = vmatpush1.msra.mxu0 0.0
  %1062 = vmatprep.subr.mxu0 0.0
  %1063 = vmatpush1.msra.mxu0 0.0
  %1064 = vmatprep.subr.mxu0 0.0
  %1065 = vmatpush1.msra.mxu0 0.0
  %1066 = vmatprep.subr.mxu0 0.0
  %1067 = vmatpush1.msra.mxu0 0.0
  %1068 = vmatprep.subr.mxu0 0.0
  %1069 = vmatpush1.msra.mxu0 0.0
  %1070 = vmatprep.subr.mxu0 0.0
  %1071 = vmatpush1.msra.mxu0 0.0
  %1072 = vmatprep.subr.mxu0 0.0
  %1073 = vmatpush1.msra.mxu0 0.0
  %1074 = vmatprep.subr.mxu0 0.0
  %1075 = vmatpush1.msra.mxu0 0.0
  %1076 = vmatprep.subr.mxu0 0.0
  %1077 = vmatpush1.msra.mxu0 0.0
  %1078 = vmatprep.subr.mxu0 0.0
  %1079 = vmatpush1.msra.mxu0 0.0
  %1080 = vmatprep.subr.mxu0 0.0
  %1081 = vmatpush1.msra.mxu0 0.0
  %1082 = vmatprep.subr.mxu0 0.0
  %1083 = vmatpush1.msra.mxu0 0.0
  %1084 = vmatprep.subr.mxu0 0.0
  %1085 = vmatpush1.msra.mxu0 0.0
  %1086 = vmatprep.subr.mxu0 0.0
  %1087 = vmatpush1.msra.mxu0 0.0
  %1088 = vmatprep.subr.mxu0 0.0
  %1089 = vmatpush1.msra.mxu0 0.0
  %1090 = vmatprep.subr.mxu0 0.0
  %1091 = vmatpush1.msra.mxu0 0.0
  %1092 = vmatprep.subr.mxu0 0.0
  %1093 = vmatpush1.msra.mxu0 0.0
  %1094 = vmatprep.subr.mxu0 0.0
  %1095 = vmatpush1.msra.mxu0 0.0
  %1096 = vmatprep.subr.mxu0 0.0
  %1097 = vmatpush1.msra.mxu0 0.0
  %1098 = vmatprep.subr.mxu0 0.0
  %1099 = vmatpush1.msra.mxu0 0.0
  %1100 = vmatprep.mubr.f32.mxu0 0.0
  %v1101 = vand.u32 %v34, 4294901760
  %v1102 = vsub.f32 %v34, %v1101
  %v1103 = vand.u32 %v1102, 4294901760
  %v1104 = vsub.f32 %v1102, %v1103
  %v1105 = vand.u32 %v1104, 4294901760
  %1106 = vmatmul.mubr.f32.gmra.mrb[0].mxu0 %v1105
  %v1107 = vpop.f32.mrb[0].mxu0
  %v1108 = vadd.f32 %v28, %v1107
  %v1109 = vpop.f32.mrb[0].mxu0
  %v1110 = vadd.f32 %v28, %v1109
  %1111 = vdwg.mxu0
  %v1112 = vand.u32 %v1032, 4294901760
  %v1113 = vsub.f32 %v1032, %v1112
  %v1114 = vand.u32 %v1113, 4294901760
  %v1115 = vsub.f32 %v1113, %v1114
  %v1116 = vand.u32 %v1115, 4294901760
  %1117 = vmatprep.subr.mxu0 %v1116
  %v1118 = vand.u32 %v1030, 4294901760
  %v1119 = vsub.f32 %v1030, %v1118
  %v1120 = vand.u32 %v1119, 4294901760
  %v1121 = vsub.f32 %v1119, %v1120
  %v1122 = vand.u32 %v1121, 4294901760
  %1123 = vmatpush1.msra.mxu0 %v1122
  %1124 = vmatprep.subr.mxu0 0.0
  %1125 = vmatpush1.msra.mxu0 0.0
  %1126 = vmatprep.subr.mxu0 0.0
  %1127 = vmatpush1.msra.mxu0 0.0
  %1128 = vmatprep.subr.mxu0 0.0
  %1129 = vmatpush1.msra.mxu0 0.0
  %1130 = vmatprep.subr.mxu0 0.0
  %1131 = vmatpush1.msra.mxu0 0.0
  %1132 = vmatprep.subr.mxu0 0.0
  %1133 = vmatpush1.msra.mxu0 0.0
  %1134 = vmatprep.subr.mxu0 0.0
  %1135 = vmatpush1.msra.mxu0 0.0
  %1136 = vmatprep.subr.mxu0 0.0
  %1137 = vmatpush1.msra.mxu0 0.0
  %1138 = vmatprep.subr.mxu0 0.0
  %1139 = vmatpush1.msra.mxu0 0.0
  %1140 = vmatprep.subr.mxu0 0.0
  %1141 = vmatpush1.msra.mxu0 0.0
  %1142 = vmatprep.subr.mxu0 0.0
  %1143 = vmatpush1.msra.mxu0 0.0
  %1144 = vmatprep.subr.mxu0 0.0
  %1145 = vmatpush1.msra.mxu0 0.0
  %1146 = vmatprep.subr.mxu0 0.0
  %1147 = vmatpush1.msra.mxu0 0.0
  %1148 = vmatprep.subr.mxu0 0.0
  %1149 = vmatpush1.msra.mxu0 0.0
  %1150 = vmatprep.subr.mxu0 0.0
  %1151 = vmatpush1.msra.mxu0 0.0
  %1152 = vmatprep.subr.mxu0 0.0
  %1153 = vmatpush1.msra.mxu0 0.0
  %1154 = vmatprep.subr.mxu0 0.0
  %1155 = vmatpush1.msra.mxu0 0.0
  %1156 = vmatprep.subr.mxu0 0.0
  %1157 = vmatpush1.msra.mxu0 0.0
  %1158 = vmatprep.subr.mxu0 0.0
  %1159 = vmatpush1.msra.mxu0 0.0
  %1160 = vmatprep.subr.mxu0 0.0
  %1161 = vmatpush1.msra.mxu0 0.0
  %1162 = vmatprep.subr.mxu0 0.0
  %1163 = vmatpush1.msra.mxu0 0.0
  %1164 = vmatprep.subr.mxu0 0.0
  %1165 = vmatpush1.msra.mxu0 0.0
  %1166 = vmatprep.subr.mxu0 0.0
  %1167 = vmatpush1.msra.mxu0 0.0
  %1168 = vmatprep.subr.mxu0 0.0
  %1169 = vmatpush1.msra.mxu0 0.0
  %1170 = vmatprep.subr.mxu0 0.0
  %1171 = vmatpush1.msra.mxu0 0.0
  %1172 = vmatprep.subr.mxu0 0.0
  %1173 = vmatpush1.msra.mxu0 0.0
  %1174 = vmatprep.subr.mxu0 0.0
  %1175 = vmatpush1.msra.mxu0 0.0
  %1176 = vmatprep.subr.mxu0 0.0
  %1177 = vmatpush1.msra.mxu0 0.0
  %1178 = vmatprep.subr.mxu0 0.0
  %1179 = vmatpush1.msra.mxu0 0.0
  %1180 = vmatprep.subr.mxu0 0.0
  %1181 = vmatpush1.msra.mxu0 0.0
  %1182 = vmatprep.subr.mxu0 0.0
  %1183 = vmatpush1.msra.mxu0 0.0
  %1184 = vmatprep.subr.mxu0 0.0
  %1185 = vmatpush1.msra.mxu0 0.0
  %1186 = vmatprep.mubr.f32.mxu0 0.0
  %v1187 = vand.u32 %v34, 4294901760
  %1188 = vmatmul.mubr.f32.gmra.mrb[0].mxu0 %v1187
  %v1189 = vpop.f32.mrb[0].mxu0
  %v1190 = vadd.f32 %v1108, %v1189
  %v1191 = vpop.f32.mrb[0].mxu0
  %v1192 = vadd.f32 %v1110, %v1191
  %1193 = vdwg.mxu0
  %v1194 = vand.u32 %v1032, 4294901760
  %v1195 = vsub.f32 %v1032, %v1194
  %1196 = vmatprep.subr.mxu0 %v1195
  %v1197 = vand.u32 %v1030, 4294901760
  %v1198 = vsub.f32 %v1030, %v1197
  %1199 = vmatpush1.msra.mxu0 %v1198
  %1200 = vmatprep.subr.mxu0 0.0
  %1201 = vmatpush1.msra.mxu0 0.0
  %1202 = vmatprep.subr.mxu0 0.0
  %1203 = vmatpush1.msra.mxu0 0.0
  %1204 = vmatprep.subr.mxu0 0.0
  %1205 = vmatpush1.msra.mxu0 0.0
  %1206 = vmatprep.subr.mxu0 0.0
  %1207 = vmatpush1.msra.mxu0 0.0
  %1208 = vmatprep.subr.mxu0 0.0
  %1209 = vmatpush1.msra.mxu0 0.0
  %1210 = vmatprep.subr.mxu0 0.0
  %1211 = vmatpush1.msra.mxu0 0.0
  %1212 = vmatprep.subr.mxu0 0.0
  %1213 = vmatpush1.msra.mxu0 0.0
  %1214 = vmatprep.subr.mxu0 0.0
  %1215 = vmatpush1.msra.mxu0 0.0
  %1216 = vmatprep.subr.mxu0 0.0
  %1217 = vmatpush1.msra.mxu0 0.0
  %1218 = vmatprep.subr.mxu0 0.0
  %1219 = vmatpush1.msra.mxu0 0.0
  %1220 = vmatprep.subr.mxu0 0.0
  %1221 = vmatpush1.msra.mxu0 0.0
  %1222 = vmatprep.subr.mxu0 0.0
  %1223 = vmatpush1.msra.mxu0 0.0
  %1224 = vmatprep.subr.mxu0 0.0
  %1225 = vmatpush1.msra.mxu0 0.0
  %1226 = vmatprep.subr.mxu0 0.0
  %1227 = vmatpush1.msra.mxu0 0.0
  %1228 = vmatprep.subr.mxu0 0.0
  %1229 = vmatpush1.msra.mxu0 0.0
  %1230 = vmatprep.subr.mxu0 0.0
  %1231 = vmatpush1.msra.mxu0 0.0
  %1232 = vmatprep.subr.mxu0 0.0
  %1233 = vmatpush1.msra.mxu0 0.0
  %1234 = vmatprep.subr.mxu0 0.0
  %1235 = vmatpush1.msra.mxu0 0.0
  %1236 = vmatprep.subr.mxu0 0.0
  %1237 = vmatpush1.msra.mxu0 0.0
  %1238 = vmatprep.subr.mxu0 0.0
  %1239 = vmatpush1.msra.mxu0 0.0
  %1240 = vmatprep.subr.mxu0 0.0
  %1241 = vmatpush1.msra.mxu0 0.0
  %1242 = vmatprep.subr.mxu0 0.0
  %1243 = vmatpush1.msra.mxu0 0.0
  %1244 = vmatprep.subr.mxu0 0.0
  %1245 = vmatpush1.msra.mxu0 0.0
  %1246 = vmatprep.subr.mxu0 0.0
  %1247 = vmatpush1.msra.mxu0 0.0
  %1248 = vmatprep.subr.mxu0 0.0
  %1249 = vmatpush1.msra.mxu0 0.0
  %1250 = vmatprep.subr.mxu0 0.0
  %1251 = vmatpush1.msra.mxu0 0.0
  %1252 = vmatprep.subr.mxu0 0.0
  %1253 = vmatpush1.msra.mxu0 0.0
  %1254 = vmatprep.subr.mxu0 0.0
  %1255 = vmatpush1.msra.mxu0 0.0
  %1256 = vmatprep.subr.mxu0 0.0
  %1257 = vmatpush1.msra.mxu0 0.0
  %1258 = vmatprep.subr.mxu0 0.0
  %1259 = vmatpush1.msra.mxu0 0.0
  %1260 = vmatprep.subr.mxu0 0.0
  %1261 = vmatpush1.msra.mxu0 0.0
  %1262 = vmatprep.mubr.f32.mxu0 0.0
  %v1263 = vand.u32 %v34, 4294901760
  %v1264 = vsub.f32 %v34, %v1263
  %1265 = vmatmul.mubr.f32.gmra.mrb[0].mxu0 %v1264
  %v1266 = vpop.f32.mrb[0].mxu0
  %v1267 = vadd.f32 %v1190, %v1266
  %v1268 = vpop.f32.mrb[0].mxu0
  %v1269 = vadd.f32 %v1192, %v1268
  %1270 = vdwg.mxu0
  %v1271 = vand.u32 %v1032, 4294901760
  %1272 = vmatprep.subr.mxu0 %v1271
  %v1273 = vand.u32 %v1030, 4294901760
  %1274 = vmatpush1.msra.mxu0 %v1273
  %1275 = vmatprep.subr.mxu0 0.0
  %1276 = vmatpush1.msra.mxu0 0.0
  %1277 = vmatprep.subr.mxu0 0.0
  %1278 = vmatpush1.msra.mxu0 0.0
  %1279 = vmatprep.subr.mxu0 0.0
  %1280 = vmatpush1.msra.mxu0 0.0
  %1281 = vmatprep.subr.mxu0 0.0
  %1282 = vmatpush1.msra.mxu0 0.0
  %1283 = vmatprep.subr.mxu0 0.0
  %1284 = vmatpush1.msra.mxu0 0.0
  %1285 = vmatprep.subr.mxu0 0.0
  %1286 = vmatpush1.msra.mxu0 0.0
  %1287 = vmatprep.subr.mxu0 0.0
  %1288 = vmatpush1.msra.mxu0 0.0
  %1289 = vmatprep.subr.mxu0 0.0
  %1290 = vmatpush1.msra.mxu0 0.0
  %1291 = vmatprep.subr.mxu0 0.0
  %1292 = vmatpush1.msra.mxu0 0.0
  %1293 = vmatprep.subr.mxu0 0.0
  %1294 = vmatpush1.msra.mxu0 0.0
  %1295 = vmatprep.subr.mxu0 0.0
  %1296 = vmatpush1.msra.mxu0 0.0
  %1297 = vmatprep.subr.mxu0 0.0
  %1298 = vmatpush1.msra.mxu0 0.0
  %1299 = vmatprep.subr.mxu0 0.0
  %1300 = vmatpush1.msra.mxu0 0.0
  %1301 = vmatprep.subr.mxu0 0.0
  %1302 = vmatpush1.msra.mxu0 0.0
  %1303 = vmatprep.subr.mxu0 0.0
  %1304 = vmatpush1.msra.mxu0 0.0
  %1305 = vmatprep.subr.mxu0 0.0
  %1306 = vmatpush1.msra.mxu0 0.0
  %1307 = vmatprep.subr.mxu0 0.0
  %1308 = vmatpush1.msra.mxu0 0.0
  %1309 = vmatprep.subr.mxu0 0.0
  %1310 = vmatpush1.msra.mxu0 0.0
  %1311 = vmatprep.subr.mxu0 0.0
  %1312 = vmatpush1.msra.mxu0 0.0
  %1313 = vmatprep.subr.mxu0 0.0
  %1314 = vmatpush1.msra.mxu0 0.0
  %1315 = vmatprep.subr.mxu0 0.0
  %1316 = vmatpush1.msra.mxu0 0.0
  %1317 = vmatprep.subr.mxu0 0.0
  %1318 = vmatpush1.msra.mxu0 0.0
  %1319 = vmatprep.subr.mxu0 0.0
  %1320 = vmatpush1.msra.mxu0 0.0
  %1321 = vmatprep.subr.mxu0 0.0
  %1322 = vmatpush1.msra.mxu0 0.0
  %1323 = vmatprep.subr.mxu0 0.0
  %1324 = vmatpush1.msra.mxu0 0.0
  %1325 = vmatprep.subr.mxu0 0.0
  %1326 = vmatpush1.msra.mxu0 0.0
  %1327 = vmatprep.subr.mxu0 0.0
  %1328 = vmatpush1.msra.mxu0 0.0
  %1329 = vmatprep.subr.mxu0 0.0
  %1330 = vmatpush1.msra.mxu0 0.0
  %1331 = vmatprep.subr.mxu0 0.0
  %1332 = vmatpush1.msra.mxu0 0.0
  %1333 = vmatprep.subr.mxu0 0.0
  %1334 = vmatpush1.msra.mxu0 0.0
  %1335 = vmatprep.subr.mxu0 0.0
  %1336 = vmatpush1.msra.mxu0 0.0
  %1337 = vmatprep.mubr.f32.mxu0 0.0
  %v1338 = vand.u32 %v34, 4294901760
  %v1339 = vsub.f32 %v34, %v1338
  %v1340 = vand.u32 %v1339, 4294901760
  %1341 = vmatmul.mubr.f32.gmra.mrb[0].mxu0 %v1340
  %v1342 = vpop.f32.mrb[0].mxu0
  %v1343 = vadd.f32 %v1267, %v1342
  %v1344 = vpop.f32.mrb[0].mxu0
  %v1345 = vadd.f32 %v1269, %v1344
  %1346 = vdwg.mxu0
  %v1347 = vand.u32 %v1032, 4294901760
  %v1348 = vsub.f32 %v1032, %v1347
  %v1349 = vand.u32 %v1348, 4294901760
  %1350 = vmatprep.subr.mxu0 %v1349
  %v1351 = vand.u32 %v1030, 4294901760
  %v1352 = vsub.f32 %v1030, %v1351
  %v1353 = vand.u32 %v1352, 4294901760
  %1354 = vmatpush1.msra.mxu0 %v1353
  %1355 = vmatprep.subr.mxu0 0.0
  %1356 = vmatpush1.msra.mxu0 0.0
  %1357 = vmatprep.subr.mxu0 0.0
  %1358 = vmatpush1.msra.mxu0 0.0
  %1359 = vmatprep.subr.mxu0 0.0
  %1360 = vmatpush1.msra.mxu0 0.0
  %1361 = vmatprep.subr.mxu0 0.0
  %1362 = vmatpush1.msra.mxu0 0.0
  %1363 = vmatprep.subr.mxu0 0.0
  %1364 = vmatpush1.msra.mxu0 0.0
  %1365 = vmatprep.subr.mxu0 0.0
  %1366 = vmatpush1.msra.mxu0 0.0
  %1367 = vmatprep.subr.mxu0 0.0
  %1368 = vmatpush1.msra.mxu0 0.0
  %1369 = vmatprep.subr.mxu0 0.0
  %1370 = vmatpush1.msra.mxu0 0.0
  %1371 = vmatprep.subr.mxu0 0.0
  %1372 = vmatpush1.msra.mxu0 0.0
  %1373 = vmatprep.subr.mxu0 0.0
  %1374 = vmatpush1.msra.mxu0 0.0
  %1375 = vmatprep.subr.mxu0 0.0
  %1376 = vmatpush1.msra.mxu0 0.0
  %1377 = vmatprep.subr.mxu0 0.0
  %1378 = vmatpush1.msra.mxu0 0.0
  %1379 = vmatprep.subr.mxu0 0.0
  %1380 = vmatpush1.msra.mxu0 0.0
  %1381 = vmatprep.subr.mxu0 0.0
  %1382 = vmatpush1.msra.mxu0 0.0
  %1383 = vmatprep.subr.mxu0 0.0
  %1384 = vmatpush1.msra.mxu0 0.0
  %1385 = vmatprep.subr.mxu0 0.0
  %1386 = vmatpush1.msra.mxu0 0.0
  %1387 = vmatprep.subr.mxu0 0.0
  %1388 = vmatpush1.msra.mxu0 0.0
  %1389 = vmatprep.subr.mxu0 0.0
  %1390 = vmatpush1.msra.mxu0 0.0
  %1391 = vmatprep.subr.mxu0 0.0
  %1392 = vmatpush1.msra.mxu0 0.0
  %1393 = vmatprep.subr.mxu0 0.0
  %1394 = vmatpush1.msra.mxu0 0.0
  %1395 = vmatprep.subr.mxu0 0.0
  %1396 = vmatpush1.msra.mxu0 0.0
  %1397 = vmatprep.subr.mxu0 0.0
  %1398 = vmatpush1.msra.mxu0 0.0
  %1399 = vmatprep.subr.mxu0 0.0
  %1400 = vmatpush1.msra.mxu0 0.0
  %1401 = vmatprep.subr.mxu0 0.0
  %1402 = vmatpush1.msra.mxu0 0.0
  %1403 = vmatprep.subr.mxu0 0.0
  %1404 = vmatpush1.msra.mxu0 0.0
  %1405 = vmatprep.subr.mxu0 0.0
  %1406 = vmatpush1.msra.mxu0 0.0
  %1407 = vmatprep.subr.mxu0 0.0
  %1408 = vmatpush1.msra.mxu0 0.0
  %1409 = vmatprep.subr.mxu0 0.0
  %1410 = vmatpush1.msra.mxu0 0.0
  %1411 = vmatprep.subr.mxu0 0.0
  %1412 = vmatpush1.msra.mxu0 0.0
  %1413 = vmatprep.subr.mxu0 0.0
  %1414 = vmatpush1.msra.mxu0 0.0
  %1415 = vmatprep.subr.mxu0 0.0
  %1416 = vmatpush1.msra.mxu0 0.0
  %1417 = vmatprep.mubr.f32.mxu0 0.0
  %v1418 = vand.u32 %v34, 4294901760
  %1419 = vmatmul.mubr.f32.gmra.mrb[0].mxu0 %v1418
  %v1420 = vpop.f32.mrb[0].mxu0
  %v1421 = vadd.f32 %v1343, %v1420
  %v1422 = vpop.f32.mrb[0].mxu0
  %v1423 = vadd.f32 %v1345, %v1422
  %1424 = vdwg.mxu0
  %v1425 = vand.u32 %v1032, 4294901760
  %1426 = vmatprep.subr.mxu0 %v1425
  %v1427 = vand.u32 %v1030, 4294901760
  %1428 = vmatpush1.msra.mxu0 %v1427
  %1429 = vmatprep.subr.mxu0 0.0
  %1430 = vmatpush1.msra.mxu0 0.0
  %1431 = vmatprep.subr.mxu0 0.0
  %1432 = vmatpush1.msra.mxu0 0.0
  %1433 = vmatprep.subr.mxu0 0.0
  %1434 = vmatpush1.msra.mxu0 0.0
  %1435 = vmatprep.subr.mxu0 0.0
  %1436 = vmatpush1.msra.mxu0 0.0
  %1437 = vmatprep.subr.mxu0 0.0
  %1438 = vmatpush1.msra.mxu0 0.0
  %1439 = vmatprep.subr.mxu0 0.0
  %1440 = vmatpush1.msra.mxu0 0.0
  %1441 = vmatprep.subr.mxu0 0.0
  %1442 = vmatpush1.msra.mxu0 0.0
  %1443 = vmatprep.subr.mxu0 0.0
  %1444 = vmatpush1.msra.mxu0 0.0
  %1445 = vmatprep.subr.mxu0 0.0
  %1446 = vmatpush1.msra.mxu0 0.0
  %1447 = vmatprep.subr.mxu0 0.0
  %1448 = vmatpush1.msra.mxu0 0.0
  %1449 = vmatprep.subr.mxu0 0.0
  %1450 = vmatpush1.msra.mxu0 0.0
  %1451 = vmatprep.subr.mxu0 0.0
  %1452 = vmatpush1.msra.mxu0 0.0
  %1453 = vmatprep.subr.mxu0 0.0
  %1454 = vmatpush1.msra.mxu0 0.0
  %1455 = vmatprep.subr.mxu0 0.0
  %1456 = vmatpush1.msra.mxu0 0.0
  %1457 = vmatprep.subr.mxu0 0.0
  %1458 = vmatpush1.msra.mxu0 0.0
  %1459 = vmatprep.subr.mxu0 0.0
  %1460 = vmatpush1.msra.mxu0 0.0
  %1461 = vmatprep.subr.mxu0 0.0
  %1462 = vmatpush1.msra.mxu0 0.0
  %1463 = vmatprep.subr.mxu0 0.0
  %1464 = vmatpush1.msra.mxu0 0.0
  %1465 = vmatprep.subr.mxu0 0.0
  %1466 = vmatpush1.msra.mxu0 0.0
  %1467 = vmatprep.subr.mxu0 0.0
  %1468 = vmatpush1.msra.mxu0 0.0
  %1469 = vmatprep.subr.mxu0 0.0
  %1470 = vmatpush1.msra.mxu0 0.0
  %1471 = vmatprep.subr.mxu0 0.0
  %1472 = vmatpush1.msra.mxu0 0.0
  %1473 = vmatprep.subr.mxu0 0.0
  %1474 = vmatpush1.msra.mxu0 0.0
  %1475 = vmatprep.subr.mxu0 0.0
  %1476 = vmatpush1.msra.mxu0 0.0
  %1477 = vmatprep.subr.mxu0 0.0
  %1478 = vmatpush1.msra.mxu0 0.0
  %1479 = vmatprep.subr.mxu0 0.0
  %1480 = vmatpush1.msra.mxu0 0.0
  %1481 = vmatprep.subr.mxu0 0.0
  %1482 = vmatpush1.msra.mxu0 0.0
  %1483 = vmatprep.subr.mxu0 0.0
  %1484 = vmatpush1.msra.mxu0 0.0
  %1485 = vmatprep.subr.mxu0 0.0
  %1486 = vmatpush1.msra.mxu0 0.0
  %1487 = vmatprep.subr.mxu0 0.0
  %1488 = vmatpush1.msra.mxu0 0.0
  %1489 = vmatprep.subr.mxu0 0.0
  %1490 = vmatpush1.msra.mxu0 0.0
  %1491 = vmatprep.mubr.f32.mxu0 0.0
  %v1492 = vand.u32 %v34, 4294901760
  %1493 = vmatmul.mubr.f32.gmra.mrb[0].mxu0 %v1492
  %v1494 = vpop.f32.mrb[0].mxu0
  %v1495 = vadd.f32 %v1421, %v1494
  %v1496 = vpop.f32.mrb[0].mxu0
  %v1497 = vadd.f32 %v1423, %v1496
  %1498 = vdwg.mxu0
  %v1499 = vmax.f32 %v1495, -60.0
  %v1500 = vmax.f32 %v1497, -60.0
  %v1501 = vsub.f32 0.0, %v1499
  %v1502 = vsub.f32 0.0, %v1500
  %v1503 = vmul.f32 %v1501, 1.442695
  %v1504 = vpow.pop %v1503
  %v1505 = vmul.f32 %v1502, 1.442695
  %v1506 = vpow.pop %v1505
  %v1507 = vadd.f32 %v1504, 1.0
  %v1508 = vadd.f32 %v1506, 1.0
  %v1509 = vrcp.pop %v1507
  %v1510 = vrcp.pop %v1508
  %v1511 = vmul.f32 %v1507, %v1509
  %v1512 = vmul.f32 %v1508, %v1510
  %v1513 = vsub.f32 2.0, %v1511
  %v1514 = vsub.f32 2.0, %v1512
  %v1515 = vmul.f32 %v1509, %v1513
  %v1516 = vmul.f32 %v1510, %v1514
  %v1518 = vsel %vm36, %v1515, 0
  %v1521 = vsel %vm36, %v1516, 0
  %v1523 = vand.u32 %v1521, 4294901760
  %1524 = vmatprep.subr.mxu0 %v1523
  %v1525 = vand.u32 %v1518, 4294901760
  %1526 = vmatpush1.msra.mxu0 %v1525
  %1527 = vmatprep.subr.mxu0 0.0
  %1528 = vmatpush1.msra.mxu0 0.0
  %1529 = vmatprep.subr.mxu0 0.0
  %1530 = vmatpush1.msra.mxu0 0.0
  %1531 = vmatprep.subr.mxu0 0.0
  %1532 = vmatpush1.msra.mxu0 0.0
  %1533 = vmatprep.subr.mxu0 0.0
  %1534 = vmatpush1.msra.mxu0 0.0
  %1535 = vmatprep.subr.mxu0 0.0
  %1536 = vmatpush1.msra.mxu0 0.0
  %1537 = vmatprep.subr.mxu0 0.0
  %1538 = vmatpush1.msra.mxu0 0.0
  %1539 = vmatprep.subr.mxu0 0.0
  %1540 = vmatpush1.msra.mxu0 0.0
  %1541 = vmatprep.subr.mxu0 0.0
  %1542 = vmatpush1.msra.mxu0 0.0
  %1543 = vmatprep.subr.mxu0 0.0
  %1544 = vmatpush1.msra.mxu0 0.0
  %1545 = vmatprep.subr.mxu0 0.0
  %1546 = vmatpush1.msra.mxu0 0.0
  %1547 = vmatprep.subr.mxu0 0.0
  %1548 = vmatpush1.msra.mxu0 0.0
  %1549 = vmatprep.subr.mxu0 0.0
  %1550 = vmatpush1.msra.mxu0 0.0
  %1551 = vmatprep.subr.mxu0 0.0
  %1552 = vmatpush1.msra.mxu0 0.0
  %1553 = vmatprep.subr.mxu0 0.0
  %1554 = vmatpush1.msra.mxu0 0.0
  %1555 = vmatprep.subr.mxu0 0.0
  %1556 = vmatpush1.msra.mxu0 0.0
  %1557 = vmatprep.subr.mxu0 0.0
  %1558 = vmatpush1.msra.mxu0 0.0
  %1559 = vmatprep.subr.mxu0 0.0
  %1560 = vmatpush1.msra.mxu0 0.0
  %1561 = vmatprep.subr.mxu0 0.0
  %1562 = vmatpush1.msra.mxu0 0.0
  %1563 = vmatprep.subr.mxu0 0.0
  %1564 = vmatpush1.msra.mxu0 0.0
  %1565 = vmatprep.subr.mxu0 0.0
  %1566 = vmatpush1.msra.mxu0 0.0
  %1567 = vmatprep.subr.mxu0 0.0
  %1568 = vmatpush1.msra.mxu0 0.0
  %1569 = vmatprep.subr.mxu0 0.0
  %1570 = vmatpush1.msra.mxu0 0.0
  %1571 = vmatprep.subr.mxu0 0.0
  %1572 = vmatpush1.msra.mxu0 0.0
  %1573 = vmatprep.subr.mxu0 0.0
  %1574 = vmatpush1.msra.mxu0 0.0
  %1575 = vmatprep.subr.mxu0 0.0
  %1576 = vmatpush1.msra.mxu0 0.0
  %1577 = vmatprep.subr.mxu0 0.0
  %1578 = vmatpush1.msra.mxu0 0.0
  %1579 = vmatprep.subr.mxu0 0.0
  %1580 = vmatpush1.msra.mxu0 0.0
  %1581 = vmatprep.subr.mxu0 0.0
  %1582 = vmatpush1.msra.mxu0 0.0
  %1583 = vmatprep.subr.mxu0 0.0
  %1584 = vmatpush1.msra.mxu0 0.0
  %1585 = vmatprep.subr.mxu0 0.0
  %1586 = vmatpush1.msra.mxu0 0.0
  %1587 = vmatprep.subr.mxu0 0.0
  %1588 = vmatpush1.msra.mxu0 0.0
  %1589 = vmatprep.mubr.f32.mxu0 0.0
  %v1590 = vand.u32 %v530, 4294901760
  %v1591 = vsub.f32 %v530, %v1590
  %v1592 = vand.u32 %v1591, 4294901760
  %v1593 = vsub.f32 %v1591, %v1592
  %v1594 = vand.u32 %v1593, 4294901760
  %1595 = vmatmul.mubr.f32.gmra.mrb[0].mxu0 %v1594
  %v1596 = vpop.f32.mrb[0].mxu0
  %v1597 = vadd.f32 %v527, %v1596
  %v1598 = vpop.f32.mrb[0].mxu0
  %v1599 = vadd.f32 %v527, %v1598
  %1600 = vdwg.mxu0
  %v1601 = vand.u32 %v1521, 4294901760
  %v1602 = vsub.f32 %v1521, %v1601
  %v1603 = vand.u32 %v1602, 4294901760
  %v1604 = vsub.f32 %v1602, %v1603
  %v1605 = vand.u32 %v1604, 4294901760
  %1606 = vmatprep.subr.mxu0 %v1605
  %v1607 = vand.u32 %v1518, 4294901760
  %v1608 = vsub.f32 %v1518, %v1607
  %v1609 = vand.u32 %v1608, 4294901760
  %v1610 = vsub.f32 %v1608, %v1609
  %v1611 = vand.u32 %v1610, 4294901760
  %1612 = vmatpush1.msra.mxu0 %v1611
  %1613 = vmatprep.subr.mxu0 0.0
  %1614 = vmatpush1.msra.mxu0 0.0
  %1615 = vmatprep.subr.mxu0 0.0
  %1616 = vmatpush1.msra.mxu0 0.0
  %1617 = vmatprep.subr.mxu0 0.0
  %1618 = vmatpush1.msra.mxu0 0.0
  %1619 = vmatprep.subr.mxu0 0.0
  %1620 = vmatpush1.msra.mxu0 0.0
  %1621 = vmatprep.subr.mxu0 0.0
  %1622 = vmatpush1.msra.mxu0 0.0
  %1623 = vmatprep.subr.mxu0 0.0
  %1624 = vmatpush1.msra.mxu0 0.0
  %1625 = vmatprep.subr.mxu0 0.0
  %1626 = vmatpush1.msra.mxu0 0.0
  %1627 = vmatprep.subr.mxu0 0.0
  %1628 = vmatpush1.msra.mxu0 0.0
  %1629 = vmatprep.subr.mxu0 0.0
  %1630 = vmatpush1.msra.mxu0 0.0
  %1631 = vmatprep.subr.mxu0 0.0
  %1632 = vmatpush1.msra.mxu0 0.0
  %1633 = vmatprep.subr.mxu0 0.0
  %1634 = vmatpush1.msra.mxu0 0.0
  %1635 = vmatprep.subr.mxu0 0.0
  %1636 = vmatpush1.msra.mxu0 0.0
  %1637 = vmatprep.subr.mxu0 0.0
  %1638 = vmatpush1.msra.mxu0 0.0
  %1639 = vmatprep.subr.mxu0 0.0
  %1640 = vmatpush1.msra.mxu0 0.0
  %1641 = vmatprep.subr.mxu0 0.0
  %1642 = vmatpush1.msra.mxu0 0.0
  %1643 = vmatprep.subr.mxu0 0.0
  %1644 = vmatpush1.msra.mxu0 0.0
  %1645 = vmatprep.subr.mxu0 0.0
  %1646 = vmatpush1.msra.mxu0 0.0
  %1647 = vmatprep.subr.mxu0 0.0
  %1648 = vmatpush1.msra.mxu0 0.0
  %1649 = vmatprep.subr.mxu0 0.0
  %1650 = vmatpush1.msra.mxu0 0.0
  %1651 = vmatprep.subr.mxu0 0.0
  %1652 = vmatpush1.msra.mxu0 0.0
  %1653 = vmatprep.subr.mxu0 0.0
  %1654 = vmatpush1.msra.mxu0 0.0
  %1655 = vmatprep.subr.mxu0 0.0
  %1656 = vmatpush1.msra.mxu0 0.0
  %1657 = vmatprep.subr.mxu0 0.0
  %1658 = vmatpush1.msra.mxu0 0.0
  %1659 = vmatprep.subr.mxu0 0.0
  %1660 = vmatpush1.msra.mxu0 0.0
  %1661 = vmatprep.subr.mxu0 0.0
  %1662 = vmatpush1.msra.mxu0 0.0
  %1663 = vmatprep.subr.mxu0 0.0
  %1664 = vmatpush1.msra.mxu0 0.0
  %1665 = vmatprep.subr.mxu0 0.0
  %1666 = vmatpush1.msra.mxu0 0.0
  %1667 = vmatprep.subr.mxu0 0.0
  %1668 = vmatpush1.msra.mxu0 0.0
  %1669 = vmatprep.subr.mxu0 0.0
  %1670 = vmatpush1.msra.mxu0 0.0
  %1671 = vmatprep.subr.mxu0 0.0
  %1672 = vmatpush1.msra.mxu0 0.0
  %1673 = vmatprep.subr.mxu0 0.0
  %1674 = vmatpush1.msra.mxu0 0.0
  %1675 = vmatprep.mubr.f32.mxu0 0.0
  %v1676 = vand.u32 %v530, 4294901760
  %1677 = vmatmul.mubr.f32.gmra.mrb[0].mxu0 %v1676
  %v1678 = vpop.f32.mrb[0].mxu0
  %v1679 = vadd.f32 %v1597, %v1678
  %v1680 = vpop.f32.mrb[0].mxu0
  %v1681 = vadd.f32 %v1599, %v1680
  %1682 = vdwg.mxu0
  %v1683 = vand.u32 %v1521, 4294901760
  %v1684 = vsub.f32 %v1521, %v1683
  %1685 = vmatprep.subr.mxu0 %v1684
  %v1686 = vand.u32 %v1518, 4294901760
  %v1687 = vsub.f32 %v1518, %v1686
  %1688 = vmatpush1.msra.mxu0 %v1687
  %1689 = vmatprep.subr.mxu0 0.0
  %1690 = vmatpush1.msra.mxu0 0.0
  %1691 = vmatprep.subr.mxu0 0.0
  %1692 = vmatpush1.msra.mxu0 0.0
  %1693 = vmatprep.subr.mxu0 0.0
  %1694 = vmatpush1.msra.mxu0 0.0
  %1695 = vmatprep.subr.mxu0 0.0
  %1696 = vmatpush1.msra.mxu0 0.0
  %1697 = vmatprep.subr.mxu0 0.0
  %1698 = vmatpush1.msra.mxu0 0.0
  %1699 = vmatprep.subr.mxu0 0.0
  %1700 = vmatpush1.msra.mxu0 0.0
  %1701 = vmatprep.subr.mxu0 0.0
  %1702 = vmatpush1.msra.mxu0 0.0
  %1703 = vmatprep.subr.mxu0 0.0
  %1704 = vmatpush1.msra.mxu0 0.0
  %1705 = vmatprep.subr.mxu0 0.0
  %1706 = vmatpush1.msra.mxu0 0.0
  %1707 = vmatprep.subr.mxu0 0.0
  %1708 = vmatpush1.msra.mxu0 0.0
  %1709 = vmatprep.subr.mxu0 0.0
  %1710 = vmatpush1.msra.mxu0 0.0
  %1711 = vmatprep.subr.mxu0 0.0
  %1712 = vmatpush1.msra.mxu0 0.0
  %1713 = vmatprep.subr.mxu0 0.0
  %1714 = vmatpush1.msra.mxu0 0.0
  %1715 = vmatprep.subr.mxu0 0.0
  %1716 = vmatpush1.msra.mxu0 0.0
  %1717 = vmatprep.subr.mxu0 0.0
  %1718 = vmatpush1.msra.mxu0 0.0
  %1719 = vmatprep.subr.mxu0 0.0
  %1720 = vmatpush1.msra.mxu0 0.0
  %1721 = vmatprep.subr.mxu0 0.0
  %1722 = vmatpush1.msra.mxu0 0.0
  %1723 = vmatprep.subr.mxu0 0.0
  %1724 = vmatpush1.msra.mxu0 0.0
  %1725 = vmatprep.subr.mxu0 0.0
  %1726 = vmatpush1.msra.mxu0 0.0
  %1727 = vmatprep.subr.mxu0 0.0
  %1728 = vmatpush1.msra.mxu0 0.0
  %1729 = vmatprep.subr.mxu0 0.0
  %1730 = vmatpush1.msra.mxu0 0.0
  %1731 = vmatprep.subr.mxu0 0.0
  %1732 = vmatpush1.msra.mxu0 0.0
  %1733 = vmatprep.subr.mxu0 0.0
  %1734 = vmatpush1.msra.mxu0 0.0
  %1735 = vmatprep.subr.mxu0 0.0
  %1736 = vmatpush1.msra.mxu0 0.0
  %1737 = vmatprep.subr.mxu0 0.0
  %1738 = vmatpush1.msra.mxu0 0.0
  %1739 = vmatprep.subr.mxu0 0.0
  %1740 = vmatpush1.msra.mxu0 0.0
  %1741 = vmatprep.subr.mxu0 0.0
  %1742 = vmatpush1.msra.mxu0 0.0
  %1743 = vmatprep.subr.mxu0 0.0
  %1744 = vmatpush1.msra.mxu0 0.0
  %1745 = vmatprep.subr.mxu0 0.0
  %1746 = vmatpush1.msra.mxu0 0.0
  %1747 = vmatprep.subr.mxu0 0.0
  %1748 = vmatpush1.msra.mxu0 0.0
  %1749 = vmatprep.subr.mxu0 0.0
  %1750 = vmatpush1.msra.mxu0 0.0
  %1751 = vmatprep.mubr.f32.mxu0 0.0
  %v1752 = vand.u32 %v530, 4294901760
  %v1753 = vsub.f32 %v530, %v1752
  %1754 = vmatmul.mubr.f32.gmra.mrb[0].mxu0 %v1753
  %v1755 = vpop.f32.mrb[0].mxu0
  %v1756 = vadd.f32 %v1679, %v1755
  %v1757 = vpop.f32.mrb[0].mxu0
  %v1758 = vadd.f32 %v1681, %v1757
  %1759 = vdwg.mxu0
  %v1760 = vand.u32 %v1521, 4294901760
  %1761 = vmatprep.subr.mxu0 %v1760
  %v1762 = vand.u32 %v1518, 4294901760
  %1763 = vmatpush1.msra.mxu0 %v1762
  %1764 = vmatprep.subr.mxu0 0.0
  %1765 = vmatpush1.msra.mxu0 0.0
  %1766 = vmatprep.subr.mxu0 0.0
  %1767 = vmatpush1.msra.mxu0 0.0
  %1768 = vmatprep.subr.mxu0 0.0
  %1769 = vmatpush1.msra.mxu0 0.0
  %1770 = vmatprep.subr.mxu0 0.0
  %1771 = vmatpush1.msra.mxu0 0.0
  %1772 = vmatprep.subr.mxu0 0.0
  %1773 = vmatpush1.msra.mxu0 0.0
  %1774 = vmatprep.subr.mxu0 0.0
  %1775 = vmatpush1.msra.mxu0 0.0
  %1776 = vmatprep.subr.mxu0 0.0
  %1777 = vmatpush1.msra.mxu0 0.0
  %1778 = vmatprep.subr.mxu0 0.0
  %1779 = vmatpush1.msra.mxu0 0.0
  %1780 = vmatprep.subr.mxu0 0.0
  %1781 = vmatpush1.msra.mxu0 0.0
  %1782 = vmatprep.subr.mxu0 0.0
  %1783 = vmatpush1.msra.mxu0 0.0
  %1784 = vmatprep.subr.mxu0 0.0
  %1785 = vmatpush1.msra.mxu0 0.0
  %1786 = vmatprep.subr.mxu0 0.0
  %1787 = vmatpush1.msra.mxu0 0.0
  %1788 = vmatprep.subr.mxu0 0.0
  %1789 = vmatpush1.msra.mxu0 0.0
  %1790 = vmatprep.subr.mxu0 0.0
  %1791 = vmatpush1.msra.mxu0 0.0
  %1792 = vmatprep.subr.mxu0 0.0
  %1793 = vmatpush1.msra.mxu0 0.0
  %1794 = vmatprep.subr.mxu0 0.0
  %1795 = vmatpush1.msra.mxu0 0.0
  %1796 = vmatprep.subr.mxu0 0.0
  %1797 = vmatpush1.msra.mxu0 0.0
  %1798 = vmatprep.subr.mxu0 0.0
  %1799 = vmatpush1.msra.mxu0 0.0
  %1800 = vmatprep.subr.mxu0 0.0
  %1801 = vmatpush1.msra.mxu0 0.0
  %1802 = vmatprep.subr.mxu0 0.0
  %1803 = vmatpush1.msra.mxu0 0.0
  %1804 = vmatprep.subr.mxu0 0.0
  %1805 = vmatpush1.msra.mxu0 0.0
  %1806 = vmatprep.subr.mxu0 0.0
  %1807 = vmatpush1.msra.mxu0 0.0
  %1808 = vmatprep.subr.mxu0 0.0
  %1809 = vmatpush1.msra.mxu0 0.0
  %1810 = vmatprep.subr.mxu0 0.0
  %1811 = vmatpush1.msra.mxu0 0.0
  %1812 = vmatprep.subr.mxu0 0.0
  %1813 = vmatpush1.msra.mxu0 0.0
  %1814 = vmatprep.subr.mxu0 0.0
  %1815 = vmatpush1.msra.mxu0 0.0
  %1816 = vmatprep.subr.mxu0 0.0
  %1817 = vmatpush1.msra.mxu0 0.0
  %1818 = vmatprep.subr.mxu0 0.0
  %1819 = vmatpush1.msra.mxu0 0.0
  %1820 = vmatprep.subr.mxu0 0.0
  %1821 = vmatpush1.msra.mxu0 0.0
  %1822 = vmatprep.subr.mxu0 0.0
  %1823 = vmatpush1.msra.mxu0 0.0
  %1824 = vmatprep.subr.mxu0 0.0
  %1825 = vmatpush1.msra.mxu0 0.0
  %1826 = vmatprep.mubr.f32.mxu0 0.0
  %v1827 = vand.u32 %v530, 4294901760
  %v1828 = vsub.f32 %v530, %v1827
  %v1829 = vand.u32 %v1828, 4294901760
  %1830 = vmatmul.mubr.f32.gmra.mrb[0].mxu0 %v1829
  %v1831 = vpop.f32.mrb[0].mxu0
  %v1832 = vadd.f32 %v1756, %v1831
  %v1833 = vpop.f32.mrb[0].mxu0
  %v1834 = vadd.f32 %v1758, %v1833
  %1835 = vdwg.mxu0
  %v1836 = vand.u32 %v1521, 4294901760
  %v1837 = vsub.f32 %v1521, %v1836
  %v1838 = vand.u32 %v1837, 4294901760
  %1839 = vmatprep.subr.mxu0 %v1838
  %v1840 = vand.u32 %v1518, 4294901760
  %v1841 = vsub.f32 %v1518, %v1840
  %v1842 = vand.u32 %v1841, 4294901760
  %1843 = vmatpush1.msra.mxu0 %v1842
  %1844 = vmatprep.subr.mxu0 0.0
  %1845 = vmatpush1.msra.mxu0 0.0
  %1846 = vmatprep.subr.mxu0 0.0
  %1847 = vmatpush1.msra.mxu0 0.0
  %1848 = vmatprep.subr.mxu0 0.0
  %1849 = vmatpush1.msra.mxu0 0.0
  %1850 = vmatprep.subr.mxu0 0.0
  %1851 = vmatpush1.msra.mxu0 0.0
  %1852 = vmatprep.subr.mxu0 0.0
  %1853 = vmatpush1.msra.mxu0 0.0
  %1854 = vmatprep.subr.mxu0 0.0
  %1855 = vmatpush1.msra.mxu0 0.0
  %1856 = vmatprep.subr.mxu0 0.0
  %1857 = vmatpush1.msra.mxu0 0.0
  %1858 = vmatprep.subr.mxu0 0.0
  %1859 = vmatpush1.msra.mxu0 0.0
  %1860 = vmatprep.subr.mxu0 0.0
  %1861 = vmatpush1.msra.mxu0 0.0
  %1862 = vmatprep.subr.mxu0 0.0
  %1863 = vmatpush1.msra.mxu0 0.0
  %1864 = vmatprep.subr.mxu0 0.0
  %1865 = vmatpush1.msra.mxu0 0.0
  %1866 = vmatprep.subr.mxu0 0.0
  %1867 = vmatpush1.msra.mxu0 0.0
  %1868 = vmatprep.subr.mxu0 0.0
  %1869 = vmatpush1.msra.mxu0 0.0
  %1870 = vmatprep.subr.mxu0 0.0
  %1871 = vmatpush1.msra.mxu0 0.0
  %1872 = vmatprep.subr.mxu0 0.0
  %1873 = vmatpush1.msra.mxu0 0.0
  %1874 = vmatprep.subr.mxu0 0.0
  %1875 = vmatpush1.msra.mxu0 0.0
  %1876 = vmatprep.subr.mxu0 0.0
  %1877 = vmatpush1.msra.mxu0 0.0
  %1878 = vmatprep.subr.mxu0 0.0
  %1879 = vmatpush1.msra.mxu0 0.0
  %1880 = vmatprep.subr.mxu0 0.0
  %1881 = vmatpush1.msra.mxu0 0.0
  %1882 = vmatprep.subr.mxu0 0.0
  %1883 = vmatpush1.msra.mxu0 0.0
  %1884 = vmatprep.subr.mxu0 0.0
  %1885 = vmatpush1.msra.mxu0 0.0
  %1886 = vmatprep.subr.mxu0 0.0
  %1887 = vmatpush1.msra.mxu0 0.0
  %1888 = vmatprep.subr.mxu0 0.0
  %1889 = vmatpush1.msra.mxu0 0.0
  %1890 = vmatprep.subr.mxu0 0.0
  %1891 = vmatpush1.msra.mxu0 0.0
  %1892 = vmatprep.subr.mxu0 0.0
  %1893 = vmatpush1.msra.mxu0 0.0
  %1894 = vmatprep.subr.mxu0 0.0
  %1895 = vmatpush1.msra.mxu0 0.0
  %1896 = vmatprep.subr.mxu0 0.0
  %1897 = vmatpush1.msra.mxu0 0.0
  %1898 = vmatprep.subr.mxu0 0.0
  %1899 = vmatpush1.msra.mxu0 0.0
  %1900 = vmatprep.subr.mxu0 0.0
  %1901 = vmatpush1.msra.mxu0 0.0
  %1902 = vmatprep.subr.mxu0 0.0
  %1903 = vmatpush1.msra.mxu0 0.0
  %1904 = vmatprep.subr.mxu0 0.0
  %1905 = vmatpush1.msra.mxu0 0.0
  %1906 = vmatprep.mubr.f32.mxu0 0.0
  %v1907 = vand.u32 %v530, 4294901760
  %1908 = vmatmul.mubr.f32.gmra.mrb[0].mxu0 %v1907
  %v1909 = vpop.f32.mrb[0].mxu0
  %v1910 = vadd.f32 %v1832, %v1909
  %v1911 = vpop.f32.mrb[0].mxu0
  %v1912 = vadd.f32 %v1834, %v1911
  %1913 = vdwg.mxu0
  %v1914 = vand.u32 %v1521, 4294901760
  %1915 = vmatprep.subr.mxu0 %v1914
  %v1916 = vand.u32 %v1518, 4294901760
  %1917 = vmatpush1.msra.mxu0 %v1916
  %1918 = vmatprep.subr.mxu0 0.0
  %1919 = vmatpush1.msra.mxu0 0.0
  %1920 = vmatprep.subr.mxu0 0.0
  %1921 = vmatpush1.msra.mxu0 0.0
  %1922 = vmatprep.subr.mxu0 0.0
  %1923 = vmatpush1.msra.mxu0 0.0
  %1924 = vmatprep.subr.mxu0 0.0
  %1925 = vmatpush1.msra.mxu0 0.0
  %1926 = vmatprep.subr.mxu0 0.0
  %1927 = vmatpush1.msra.mxu0 0.0
  %1928 = vmatprep.subr.mxu0 0.0
  %1929 = vmatpush1.msra.mxu0 0.0
  %1930 = vmatprep.subr.mxu0 0.0
  %1931 = vmatpush1.msra.mxu0 0.0
  %1932 = vmatprep.subr.mxu0 0.0
  %1933 = vmatpush1.msra.mxu0 0.0
  %1934 = vmatprep.subr.mxu0 0.0
  %1935 = vmatpush1.msra.mxu0 0.0
  %1936 = vmatprep.subr.mxu0 0.0
  %1937 = vmatpush1.msra.mxu0 0.0
  %1938 = vmatprep.subr.mxu0 0.0
  %1939 = vmatpush1.msra.mxu0 0.0
  %1940 = vmatprep.subr.mxu0 0.0
  %1941 = vmatpush1.msra.mxu0 0.0
  %1942 = vmatprep.subr.mxu0 0.0
  %1943 = vmatpush1.msra.mxu0 0.0
  %1944 = vmatprep.subr.mxu0 0.0
  %1945 = vmatpush1.msra.mxu0 0.0
  %1946 = vmatprep.subr.mxu0 0.0
  %1947 = vmatpush1.msra.mxu0 0.0
  %1948 = vmatprep.subr.mxu0 0.0
  %1949 = vmatpush1.msra.mxu0 0.0
  %1950 = vmatprep.subr.mxu0 0.0
  %1951 = vmatpush1.msra.mxu0 0.0
  %1952 = vmatprep.subr.mxu0 0.0
  %1953 = vmatpush1.msra.mxu0 0.0
  %1954 = vmatprep.subr.mxu0 0.0
  %1955 = vmatpush1.msra.mxu0 0.0
  %1956 = vmatprep.subr.mxu0 0.0
  %1957 = vmatpush1.msra.mxu0 0.0
  %1958 = vmatprep.subr.mxu0 0.0
  %1959 = vmatpush1.msra.mxu0 0.0
  %1960 = vmatprep.subr.mxu0 0.0
  %1961 = vmatpush1.msra.mxu0 0.0
  %1962 = vmatprep.subr.mxu0 0.0
  %1963 = vmatpush1.msra.mxu0 0.0
  %1964 = vmatprep.subr.mxu0 0.0
  %1965 = vmatpush1.msra.mxu0 0.0
  %1966 = vmatprep.subr.mxu0 0.0
  %1967 = vmatpush1.msra.mxu0 0.0
  %1968 = vmatprep.subr.mxu0 0.0
  %1969 = vmatpush1.msra.mxu0 0.0
  %1970 = vmatprep.subr.mxu0 0.0
  %1971 = vmatpush1.msra.mxu0 0.0
  %1972 = vmatprep.subr.mxu0 0.0
  %1973 = vmatpush1.msra.mxu0 0.0
  %1974 = vmatprep.subr.mxu0 0.0
  %1975 = vmatpush1.msra.mxu0 0.0
  %1976 = vmatprep.subr.mxu0 0.0
  %1977 = vmatpush1.msra.mxu0 0.0
  %1978 = vmatprep.subr.mxu0 0.0
  %1979 = vmatpush1.msra.mxu0 0.0
  %1980 = vmatprep.mubr.f32.mxu0 0.0
  %v1981 = vand.u32 %v530, 4294901760
  %1982 = vmatmul.mubr.f32.gmra.mrb[0].mxu0 %v1981
  %v1983 = vpop.f32.mrb[0].mxu0
  %v1984 = vadd.f32 %v1910, %v1983
  %v1985 = vpop.f32.mrb[0].mxu0
  %v1986 = vadd.f32 %v1912, %v1985
  %1987 = vdwg.mxu0
  %v1988 = vmax.f32 %v1984, -60.0
  %v1989 = vmax.f32 %v1986, -60.0
  %v1990 = vsub.f32 0.0, %v1988
  %v1991 = vsub.f32 0.0, %v1989
  %v1992 = vmul.f32 %v1990, 1.442695
  %v1993 = vpow.pop %v1992
  %v1994 = vmul.f32 %v1991, 1.442695
  %v1995 = vpow.pop %v1994
  %v1996 = vadd.f32 %v1993, 1.0
  %v1997 = vadd.f32 %v1995, 1.0
  %v1998 = vrcp.pop %v1996
  %v1999 = vrcp.pop %v1997
  %v2000 = vmul.f32 %v1996, %v1998
  %v2001 = vmul.f32 %v1997, %v1999
  %v2002 = vsub.f32 2.0, %v2000
  %v2003 = vsub.f32 2.0, %v2001
  %v2004 = vmul.f32 %v1998, %v2002
  %v2005 = vmul.f32 %v1999, %v2003
  %v2008 = vcombine.low %v2004, %v2005
  %s2010 = scalar_lea.vmem %s5, 8
  %2011 = vst [vmem:[%s2010] sm:$0xff] %v2008
  // Predicated region
  $region22: #{sample_module2_forward.1} parent=0 // pred_check
    _
  $region23: #{sample_module2_forward.1} parent=0 // pred_check_branch
    %2013 = sbr.rel (0) target = $region25
  $region24: #{sample_module2_forward.1} parent=0 // pred_region
    _
  $region25: #{sample_module2_forward.1} parent=0 // pred_fallthru
    _
  // Predicated region
  $region26: #{sample_module2_forward.1} parent=0 // pred_check
    _
  $region27: #{sample_module2_forward.1} parent=0 // pred_check_branch
    %2015 = sbr.rel (0) target = $region29
  $region28: #{sample_module2_forward.1} parent=0 // pred_region
    _
  $region29: #{sample_module2_forward.1} parent=0 // pred_fallthru
    _

</llo_original>
